<compile_context>
chip_gen: v7x
topology: tpu7x:2x2x1
jax: 0.10.0
libtpu: 0.0.40
codegen_flags: <defaults>
</compile_context>

<pallas_src>
import functools
import math

import jax
import jax.numpy as jnp
from jax.experimental import pallas as pl
from jax.experimental.pallas import tpu as pltpu

BN_EPS = 1e-5
LANE = 128
MATMUL_DTYPE = jnp.bfloat16       # MXU operand / activation-traffic dtype (acc stays f32)
VMEM_CAP = 48 * 1024 * 1024       # keep <= ~48 MiB so the same config fits v7x's 64 MiB


def _round_up(x, m):
    return (x + m - 1) // m * m


def _vmem_need(tm, k, cp):
    it = 2  # bf16
    # double-buffered patch + y tiles, (double-buffered) resident weights / BN vectors,
    # f32 stats scratch + (2, Cp) scale/shift block, output tile of call B.
    return (2 * tm * k * it + 2 * tm * cp * 4 + 2 * (k * cp * it + 2 * cp * 4)
            + 2 * 8 * cp * 4 + 2 * cp * 4)


def _choose_tm(m, k, cp):
    """Pick the M-tile: as large as possible (HBM roofline wants >=512 at real sizes),
    preferring an exact divisor of m so the host-side pad is a no-op, shrinking until the
    working set fits the VMEM budget."""
    if m <= 16:
        return 8
    big = (1024, 512, 256)
    small = (128, 64, 32, 16, 8)
    tm = None
    for cand in (big if m >= 2048 else big + small):
        if m % cand == 0 and m // cand >= 2:
            tm = cand
            break
    if tm is None:
        if m >= 2048:
            tm = 1024
        elif m >= 512:
            tm = 512
        else:
            tm = 128 if m >= 128 else 64
    while tm > 8 and _vmem_need(tm, k, cp) > VMEM_CAP:
        tm //= 2
    return tm


def _matmul_stats_kernel(p_ref, w_ref, g_ref, b_ref, y_ref, ss_ref,
                         s0_ref, s1_ref, *, m_true, eps):
    """One pass over M: y = P @ W stored once (bf16), streaming BN stats in VMEM scratch,
    (scale, shift) emitted on the last tile."""
    i = pl.program_id(0)
    n_m = pl.num_programs(0)

    # MXU: bf16 operands, f32 accumulation.
    y = jnp.dot(p_ref[...], w_ref[...], preferred_element_type=jnp.float32)
    y_ref[...] = y.astype(y_ref.dtype)          # single lane-dense write of un-normalized y

    @pl.when(i == 0)
    def _init():
        s0_ref[...] = jnp.zeros_like(s0_ref)
        s1_ref[...] = jnp.zeros_like(s1_ref)

    # (8, Cp) partial sums: pure vreg-row adds; cross-sublane collapse happens once below.
    tm, cp = y.shape
    yr = y.reshape(tm // 8, 8, cp)
    s0_ref[...] += jnp.sum(yr, axis=0)
    s1_ref[...] += jnp.sum(yr * yr, axis=0)

    @pl.when(i == n_m - 1)
    def _finalize():
        inv_m = 1.0 / m_true
        mean = jnp.sum(s0_ref[...], axis=0, keepdims=True) * inv_m
        # TODO(synk): E[y^2]-E[y]^2 in f32 can cancel for very large-magnitude activations;
        # switch to a mean-shifted accumulation if that ever bites.
        var = jnp.maximum(jnp.sum(s1_ref[...], axis=0, keepdims=True) * inv_m
                          - mean * mean, 0.0)   # biased variance (train-mode BN)
        scale = g_ref[...] * jax.lax.rsqrt(var + eps)
        shift = b_ref[...] - mean * scale
        ss_ref[0:1, :] = scale
        ss_ref[1:2, :] = shift


def _bn_relu_apply_kernel(ss_ref, y_ref, o_ref):
    """Pure VPU sweep: out = relu(y * scale + shift)."""
    scale = ss_ref[0:1, :]
    shift = ss_ref[1:2, :]
    y = y_ref[...].astype(jnp.float32)
    o_ref[...] = jnp.maximum(y * scale + shift, 0.0).astype(o_ref.dtype)


def _conv_bn_relu(patches, w_mat, gamma, beta, out_dtype):
    """patches: (M, K) bf16; w_mat: (K, Cp) bf16; gamma/beta: (1, Cp) f32.
    Returns (M, Cp) out_dtype = relu(batchnorm_train(patches @ w_mat)).
    Rows may be zero-padded to a tile multiple; with no conv bias, padded rows contribute
    exactly zero to the batch statistics."""
    m, k = patches.shape
    cp = w_mat.shape[1]
    tm = _choose_tm(m, k, cp)
    m_pad = _round_up(m, tm)
    n_m = m_pad // tm

    p = patches.astype(MATMUL_DTYPE)
    if m_pad != m:
        p = jnp.pad(p, ((0, m_pad - m), (0, 0)))

    vmem_limit = int(min(VMEM_CAP, max(2 * _vmem_need(tm, k, cp), 16 * 1024 * 1024)))

    # ---- call A: matmul + streaming BN statistics (sequential over M) ----------------
    kernel_a = functools.partial(_matmul_stats_kernel, m_true=float(m), eps=BN_EPS)
    y_bf16, scale_shift = pl.pallas_call(
        kernel_a,
        out_shape=(jax.ShapeDtypeStruct((m_pad, cp), MATMUL_DTYPE),
                   jax.ShapeDtypeStruct((2, cp), jnp.float32)),
        grid_spec=pltpu.PrefetchScalarGridSpec(
            num_scalar_prefetch=0,
            grid=(n_m,),
            in_specs=[
                pl.BlockSpec((tm, k), lambda i: (i, 0)),    # streamed patch tiles
                pl.BlockSpec((k, cp), lambda i: (0, 0)),    # VMEM-resident weights
                pl.BlockSpec((1, cp), lambda i: (0, 0)),    # resident gamma
                pl.BlockSpec((1, cp), lambda i: (0, 0)),    # resident beta
            ],
            out_specs=(
                pl.BlockSpec((tm, cp), lambda i: (i, 0)),   # un-normalized y (bf16)
                pl.BlockSpec((2, cp), lambda i: (0, 0)),    # (scale, shift), last tile
            ),
            scratch_shapes=[pltpu.VMEM((8, cp), jnp.float32),
                            pltpu.VMEM((8, cp), jnp.float32)],
        ),
        compiler_params=pltpu.CompilerParams(
            dimension_semantics=("arbitrary",),            # stats carry -> sequential
            vmem_limit_bytes=vmem_limit,
        ),
        cost_estimate=pl.CostEstimate(
            flops=2 * m_pad * k * cp,
            transcendentals=cp,
            bytes_accessed=m_pad * k * 2 + k * cp * 2 + m_pad * cp * 2 + 6 * cp * 4),
    )(p, w_mat, gamma, beta)

    # ---- call B: apply scale/shift + ReLU (parallel over M -> both TCs on v7x) -------
    out_it = jnp.dtype(out_dtype).itemsize
    out = pl.pallas_call(
        _bn_relu_apply_kernel,
        out_shape=jax.ShapeDtypeStruct((m_pad, cp), out_dtype),
        grid_spec=pltpu.PrefetchScalarGridSpec(
            num_scalar_prefetch=0,
            grid=(n_m,),
            in_specs=[
                pl.BlockSpec((2, cp), lambda i: (0, 0)),    # resident scale/shift
                pl.BlockSpec((tm, cp), lambda i: (i, 0)),   # streamed y tiles
            ],
            out_specs=pl.BlockSpec((tm, cp), lambda i: (i, 0)),
        ),
        compiler_params=pltpu.CompilerParams(
            dimension_semantics=("parallel",),
            vmem_limit_bytes=vmem_limit,
        ),
        cost_estimate=pl.CostEstimate(
            flops=2 * m_pad * cp,
            transcendentals=0,
            bytes_accessed=m_pad * cp * 2 + m_pad * cp * out_it + 2 * cp * 4),
    )(scale_shift, y_bf16)

    return out if m_pad == m else out[:m]


def _im2col(x_nhwc, stride):
    """3x3 conv patches, padding=1. Returns ((N*Ho*Wo, 9*C), Ho, Wo); feature ordering is
    (kh, kw, cin). Built in the dtype of x (bf16 here) so the 9x expansion stays bf16."""
    x_pad = jnp.pad(x_nhwc, ((0, 0), (1, 1), (1, 1), (0, 0)))
    n, hp, wp, c = x_pad.shape
    ho = (hp - 3) // stride + 1
    wo = (wp - 3) // stride + 1
    cols = []
    for dh in range(3):
        for dw in range(3):
            cols.append(
                x_pad[:, dh:dh + stride * ho:stride, dw:dw + stride * wo:stride, :])
    patches = jnp.concatenate(cols, axis=-1)  # (N, Ho, Wo, 9*C)
    return patches.reshape(n * ho * wo, 9 * c), ho, wo


def init_params(key, in_channels, conv_channels):
    """Kaiming-normal (fan_out, relu) init matching the module; also precomputes the
    kernel-ready weight matrices (bf16, lane-padded only when Cout >= 128) and BN params."""
    k1, k2, k3, k4 = jax.random.split(key, 4)
    cout = conv_channels
    cp = cout if cout < LANE else _round_up(cout, LANE)

    def conv_init(kw_key, kb_key, cin, co):
        fan_out = co * 3 * 3
        std = math.sqrt(2.0 / fan_out)                      # kaiming_normal_, fan_out, relu
        w = std * jax.random.normal(kw_key, (co, cin, 3, 3), jnp.float32)
        bound = 1.0 / math.sqrt(fan_out)
        b = -bound + bound * jax.random.normal(kb_key, (co,), jnp.float32)  # normal_(-bound, bound)
        return w, b

    def weight_to_mat(w_oihw):
        # (Cout, Cin, kh, kw) -> (kh*kw*Cin, Cp): rows ordered (kh, kw, cin).
        co = w_oihw.shape[0]
        mat = jnp.transpose(w_oihw, (2, 3, 1, 0)).reshape(-1, co)
        return jnp.pad(mat, ((0, 0), (0, cp - co))).astype(MATMUL_DTYPE)

    def pad_c(v):
        return jnp.pad(v, (0, cp - cout)).reshape(1, cp)

    w1, b1 = conv_init(k1, k2, in_channels, cout)
    w2, b2 = conv_init(k3, k4, cout, cout)
    ones = jnp.ones((cout,), jnp.float32)
    zeros = jnp.zeros((cout,), jnp.float32)

    return {
        # Raw module parameters. Conv biases kept for parity but NOT used: train-mode
        # BatchNorm's mean subtraction cancels a constant bias exactly.
        "w1": w1, "b1": b1, "w2": w2, "b2": b2,
        "bn1_g": ones, "bn1_b": zeros, "bn2_g": ones, "bn2_b": zeros,
        # Kernel-ready operands (precomputed outside the jitted forward).
        "w1_mat": weight_to_mat(w1),
        "w2_mat": weight_to_mat(w2),
        "bn1_g_pad": pad_c(ones), "bn1_b_pad": pad_c(zeros),
        "bn2_g_pad": pad_c(ones), "bn2_b_pad": pad_c(zeros),
    }


def resnet_block_forward(params, x_nchw):
    """Forward pass of ResnetBlock. Input/output are NCHW; output is float32."""
    n = x_nchw.shape[0]
    c_out = params["w1"].shape[0]
    # NCHW -> NHWC; all activation traffic (incl. the 9x im2col expansion) in bf16.
    x = jnp.transpose(x_nchw, (0, 2, 3, 1)).astype(MATMUL_DTYPE)

    # Stage 1: conv(3x3, stride 2, pad 1) + BN(train batch stats) + ReLU  -> bf16
    p1, ho1, wo1 = _im2col(x, stride=2)
    y1 = _conv_bn_relu(p1, params["w1_mat"], params["bn1_g_pad"], params["bn1_b_pad"],
                       out_dtype=MATMUL_DTYPE)
    if y1.shape[1] != c_out:
        y1 = y1[:, :c_out]
    y1 = y1.reshape(n, ho1, wo1, c_out)

    # Stage 2: conv(3x3, stride 1, pad 1) + BN(train batch stats) + ReLU  -> f32
    # TODO(synk): fuse with stage 1 (keep y1 + 1px halo in VMEM) to avoid this round-trip.
    p2, ho2, wo2 = _im2col(y1, stride=1)
    y2 = _conv_bn_relu(p2, params["w2_mat"], params["bn2_g_pad"], params["bn2_b_pad"],
                       out_dtype=jnp.float32)
    if y2.shape[1] != c_out:
        y2 = y2[:, :c_out]
    y2 = y2.reshape(n, ho2, wo2, c_out)

    return jnp.transpose(y2, (0, 3, 1, 2))  # NHWC -> NCHW


if __name__ == "__main__":
    in_channels, conv_channels = 4, 8
    key = jax.random.PRNGKey(0)
    k_param, k_x = jax.random.split(key)

    params = init_params(k_param, in_channels, conv_channels)
    x = jax.random.normal(k_x, (2, in_channels, 16, 16), jnp.float32)  # NCHW

    out = jax.jit(resnet_block_forward)(params, x)
    out = jax.block_until_ready(out)

    assert out.shape == (2, conv_channels, 8, 8), out.shape
    assert bool(jnp.all(jnp.isfinite(out)))
    print("KERNEL_OK")
</pallas_src>

<mosaic_0001>
module attributes {stable_mosaic.version = 11 : i64} {
  func.func @_matmul_stats_kernel(%arg0: i32, %arg1: memref<64x36xbf16, #tpu.memory_space<vmem>>, %arg2: memref<36x8xbf16, #tpu.memory_space<vmem>>, %arg3: memref<1x8xf32, #tpu.memory_space<vmem>>, %arg4: memref<1x8xf32, #tpu.memory_space<vmem>>, %arg5: memref<64x8xbf16, #tpu.memory_space<vmem>>, %arg6: memref<2x8xf32, #tpu.memory_space<vmem>>, %arg7: memref<8x8xf32, #tpu.memory_space<vmem>>, %arg8: memref<8x8xf32, #tpu.memory_space<vmem>>) attributes {dimension_semantics = [#tpu.dimension_semantics<arbitrary>], iteration_bounds = array<i64: 2>, scalar_prefetch = 0 : i64, scratch_operands = 2 : i64, tpu.core_type = #tpu.core_type<tc>, window_params = [{transform_indices = @transform_0, window_bounds = array<i64: 64, 36>}, {pipeline_mode = #tpu.pipeline_mode<synchronous>, transform_indices = @transform_1, window_bounds = array<i64: 36, 8>}, {pipeline_mode = #tpu.pipeline_mode<synchronous>, transform_indices = @transform_2, window_bounds = array<i64: 1, 8>}, {pipeline_mode = #tpu.pipeline_mode<synchronous>, transform_indices = @transform_3, window_bounds = array<i64: 1, 8>}, {transform_indices = @transform_4, window_bounds = array<i64: 64, 8>}, {pipeline_mode = #tpu.pipeline_mode<synchronous>, transform_indices = @transform_5, window_bounds = array<i64: 2, 8>}]} {
    %c0 = arith.constant 0 : index
    %c0_0 = arith.constant 0 : index
    %0 = vector.load %arg1[%c0, %c0_0] : memref<64x36xbf16, #tpu.memory_space<vmem>>, vector<64x36xbf16>
    %c0_1 = arith.constant 0 : index
    %c0_2 = arith.constant 0 : index
    %1 = vector.load %arg2[%c0_1, %c0_2] : memref<36x8xbf16, #tpu.memory_space<vmem>>, vector<36x8xbf16>
    %cst = arith.constant dense<0.000000e+00> : vector<64x8xf32>
    %2 = tpu.matmul %0, %1, %cst {dimension_numbers = #tpu.dot_dimension_numbers<[1], [0], [0], [1], [0, 0, 1, 1], [], []>} : vector<64x36xbf16>, vector<36x8xbf16>, vector<64x8xf32> -> vector<64x8xf32>
    %3 = arith.truncf %2 : vector<64x8xf32> to vector<64x8xbf16>
    %c0_3 = arith.constant 0 : index
    %c0_4 = arith.constant 0 : index
    %4 = vector.load %arg5[%c0_3, %c0_4] : memref<64x8xbf16, #tpu.memory_space<vmem>>, vector<64x8xbf16>
    tpu.vector_store %arg5[%c0_3, %c0_4], %3 {strides = array<i32>} : memref<64x8xbf16, #tpu.memory_space<vmem>>, vector<64x8xbf16>,
    %c0_i32 = arith.constant 0 : i32
    %5 = arith.cmpi eq, %arg0, %c0_i32 : i32
    %6 = arith.extui %5 : i1 to i32
    %c0_i32_5 = arith.constant 0 : i32
    %7 = arith.cmpi ne, %6, %c0_i32_5 : i32
    scf.if %7 {
      %cst_17 = arith.constant 0.000000e+00 : f32
      %21 = vector.broadcast %cst_17 : f32 to vector<8x8xf32>
      %c0_18 = arith.constant 0 : index
      %c0_19 = arith.constant 0 : index
      %22 = vector.load %arg7[%c0_18, %c0_19] : memref<8x8xf32, #tpu.memory_space<vmem>>, vector<8x8xf32>
      tpu.vector_store %arg7[%c0_18, %c0_19], %21 {strides = array<i32>} : memref<8x8xf32, #tpu.memory_space<vmem>>, vector<8x8xf32>,
      %cst_20 = arith.constant 0.000000e+00 : f32
      %23 = vector.broadcast %cst_20 : f32 to vector<8x8xf32>
      %c0_21 = arith.constant 0 : index
      %c0_22 = arith.constant 0 : index
      %24 = vector.load %arg8[%c0_21, %c0_22] : memref<8x8xf32, #tpu.memory_space<vmem>>, vector<8x8xf32>
      tpu.vector_store %arg8[%c0_21, %c0_22], %23 {strides = array<i32>} : memref<8x8xf32, #tpu.memory_space<vmem>>, vector<8x8xf32>,
    } else {
    }
    %8 = vector.shape_cast %2 : vector<64x8xf32> to vector<8x8x8xf32>
    %c0_6 = arith.constant 0 : index
    %c0_7 = arith.constant 0 : index
    %9 = vector.load %arg7[%c0_6, %c0_7] : memref<8x8xf32, #tpu.memory_space<vmem>>, vector<8x8xf32>
    %cst_8 = arith.constant dense<0.000000e+00> : vector<8x8xf32>
    %10 = vector.multi_reduction <add>, %8, %cst_8 [0] : vector<8x8x8xf32> to vector<8x8xf32>
    %11 = arith.addf %9, %10 : vector<8x8xf32>
    %c0_9 = arith.constant 0 : index
    %c0_10 = arith.constant 0 : index
    %12 = vector.load %arg7[%c0_9, %c0_10] : memref<8x8xf32, #tpu.memory_space<vmem>>, vector<8x8xf32>
    tpu.vector_store %arg7[%c0_9, %c0_10], %11 {strides = array<i32>} : memref<8x8xf32, #tpu.memory_space<vmem>>, vector<8x8xf32>,
    %c0_11 = arith.constant 0 : index
    %c0_12 = arith.constant 0 : index
    %13 = vector.load %arg8[%c0_11, %c0_12] : memref<8x8xf32, #tpu.memory_space<vmem>>, vector<8x8xf32>
    %14 = arith.mulf %8, %8 : vector<8x8x8xf32>
    %cst_13 = arith.constant dense<0.000000e+00> : vector<8x8xf32>
    %15 = vector.multi_reduction <add>, %14, %cst_13 [0] : vector<8x8x8xf32> to vector<8x8xf32>
    %16 = arith.addf %13, %15 : vector<8x8xf32>
    %c0_14 = arith.constant 0 : index
    %c0_15 = arith.constant 0 : index
    %17 = vector.load %arg8[%c0_14, %c0_15] : memref<8x8xf32, #tpu.memory_space<vmem>>, vector<8x8xf32>
    tpu.vector_store %arg8[%c0_14, %c0_15], %16 {strides = array<i32>} : memref<8x8xf32, #tpu.memory_space<vmem>>, vector<8x8xf32>,
    %c1_i32 = arith.constant 1 : i32
    %18 = arith.cmpi eq, %arg0, %c1_i32 : i32
    %19 = arith.extui %18 : i1 to i32
    %c0_i32_16 = arith.constant 0 : i32
    %20 = arith.cmpi ne, %19, %c0_i32_16 : i32
    scf.if %20 {
      %c0_17 = arith.constant 0 : index
      %c0_18 = arith.constant 0 : index
      %21 = vector.load %arg7[%c0_17, %c0_18] : memref<8x8xf32, #tpu.memory_space<vmem>>, vector<8x8xf32>
      %cst_19 = arith.constant dense<0.000000e+00> : vector<8xf32>
      %22 = vector.multi_reduction <add>, %21, %cst_19 [0] : vector<8x8xf32> to vector<8xf32>
      %23 = vector.shape_cast %22 : vector<8xf32> to vector<1x8xf32>
      %cst_20 = arith.constant 7.812500e-03 : f32
      %24 = vector.broadcast %cst_20 : f32 to vector<1x8xf32>
      %25 = arith.mulf %23, %24 : vector<1x8xf32>
      %c0_21 = arith.constant 0 : index
      %c0_22 = arith.constant 0 : index
      %26 = vector.load %arg8[%c0_21, %c0_22] : memref<8x8xf32, #tpu.memory_space<vmem>>, vector<8x8xf32>
      %cst_23 = arith.constant dense<0.000000e+00> : vector<8xf32>
      %27 = vector.multi_reduction <add>, %26, %cst_23 [0] : vector<8x8xf32> to vector<8xf32>
      %28 = vector.shape_cast %27 : vector<8xf32> to vector<1x8xf32>
      %cst_24 = arith.constant 7.812500e-03 : f32
      %29 = vector.broadcast %cst_24 : f32 to vector<1x8xf32>
      %30 = arith.mulf %28, %29 : vector<1x8xf32>
      %31 = arith.mulf %25, %25 : vector<1x8xf32>
      %32 = arith.subf %30, %31 : vector<1x8xf32>
      %cst_25 = arith.constant 0.000000e+00 : f32
      %33 = vector.broadcast %cst_25 : f32 to vector<1x8xf32>
      %34 = arith.maximumf %32, %33 : vector<1x8xf32>
      %c0_26 = arith.constant 0 : index
      %c0_27 = arith.constant 0 : index
      %35 = vector.load %arg3[%c0_26, %c0_27] : memref<1x8xf32, #tpu.memory_space<vmem>>, vector<1x8xf32>
      %cst_28 = arith.constant 9.99999974E-6 : f32
      %36 = vector.broadcast %cst_28 : f32 to vector<1x8xf32>
      %37 = arith.addf %34, %36 : vector<1x8xf32>
      %38 = math.rsqrt %37 : vector<1x8xf32>
      %39 = arith.mulf %35, %38 : vector<1x8xf32>
      %c0_29 = arith.constant 0 : index
      %c0_30 = arith.constant 0 : index
      %40 = vector.load %arg4[%c0_29, %c0_30] : memref<1x8xf32, #tpu.memory_space<vmem>>, vector<1x8xf32>
      %41 = arith.mulf %25, %39 : vector<1x8xf32>
      %42 = arith.subf %40, %41 : vector<1x8xf32>
      %c0_31 = arith.constant 0 : index
      %c0_32 = arith.constant 0 : index
      %43 = vector.load %arg6[%c0_31, %c0_32] : memref<2x8xf32, #tpu.memory_space<vmem>>, vector<1x8xf32>
      tpu.vector_store %arg6[%c0_31, %c0_32], %39 {strides = array<i32>} : memref<2x8xf32, #tpu.memory_space<vmem>>, vector<1x8xf32>,
      %c1 = arith.constant 1 : index
      %c0_33 = arith.constant 0 : index
      %44 = vector.load %arg6[%c1, %c0_33] : memref<2x8xf32, #tpu.memory_space<vmem>>, vector<1x8xf32>
      tpu.vector_store %arg6[%c1, %c0_33], %42 {strides = array<i32>} : memref<2x8xf32, #tpu.memory_space<vmem>>, vector<1x8xf32>,
    } else {
    }
    return
  }
  func.func @transform_0(%arg0: i32) -> (i32, i32) {
    %c0_i32 = arith.constant 0 : i32
    %c0_i32_0 = arith.constant 0 : i32
    return %arg0, %c0_i32 : i32, i32
  }
  func.func @transform_1(%arg0: i32) -> (i32, i32) {
    %c0_i32 = arith.constant 0 : i32
    %c0_i32_0 = arith.constant 0 : i32
    %c0_i32_1 = arith.constant 0 : i32
    return %c0_i32, %c0_i32_0 : i32, i32
  }
  func.func @transform_2(%arg0: i32) -> (i32, i32) {
    %c0_i32 = arith.constant 0 : i32
    %c0_i32_0 = arith.constant 0 : i32
    %c0_i32_1 = arith.constant 0 : i32
    return %c0_i32, %c0_i32_0 : i32, i32
  }
  func.func @transform_3(%arg0: i32) -> (i32, i32) {
    %c0_i32 = arith.constant 0 : i32
    %c0_i32_0 = arith.constant 0 : i32
    %c0_i32_1 = arith.constant 0 : i32
    return %c0_i32, %c0_i32_0 : i32, i32
  }
  func.func @transform_4(%arg0: i32) -> (i32, i32) {
    %c0_i32 = arith.constant 0 : i32
    %c0_i32_0 = arith.constant 0 : i32
    return %arg0, %c0_i32 : i32, i32
  }
  func.func @transform_5(%arg0: i32) -> (i32, i32) {
    %c0_i32 = arith.constant 0 : i32
    %c0_i32_0 = arith.constant 0 : i32
    %c0_i32_1 = arith.constant 0 : i32
    return %c0_i32, %c0_i32_0 : i32, i32
  }
}

module attributes {stable_mosaic.version = 11 : i64} {
  func.func @_bn_relu_apply_kernel(%arg0: i32, %arg1: memref<2x8xf32, #tpu.memory_space<vmem>>, %arg2: memref<64x8xbf16, #tpu.memory_space<vmem>>, %arg3: memref<64x8xbf16, #tpu.memory_space<vmem>>) attributes {dimension_semantics = [#tpu.dimension_semantics<parallel>], iteration_bounds = array<i64: 2>, scalar_prefetch = 0 : i64, scratch_operands = 0 : i64, tpu.core_type = #tpu.core_type<tc>, window_params = [{pipeline_mode = #tpu.pipeline_mode<synchronous>, transform_indices = @transform_0, window_bounds = array<i64: 2, 8>}, {transform_indices = @transform_1, window_bounds = array<i64: 64, 8>}, {transform_indices = @transform_2, window_bounds = array<i64: 64, 8>}]} {
    %c0 = arith.constant 0 : index
    %c0_0 = arith.constant 0 : index
    %0 = vector.load %arg1[%c0, %c0_0] : memref<2x8xf32, #tpu.memory_space<vmem>>, vector<1x8xf32>
    %c1 = arith.constant 1 : index
    %c0_1 = arith.constant 0 : index
    %1 = vector.load %arg1[%c1, %c0_1] : memref<2x8xf32, #tpu.memory_space<vmem>>, vector<1x8xf32>
    %c0_2 = arith.constant 0 : index
    %c0_3 = arith.constant 0 : index
    %2 = vector.load %arg2[%c0_2, %c0_3] : memref<64x8xbf16, #tpu.memory_space<vmem>>, vector<64x8xbf16>
    %3 = arith.extf %2 : vector<64x8xbf16> to vector<64x8xf32>
    %4 = vector.broadcast %0 : vector<1x8xf32> to vector<64x8xf32>
    %5 = arith.mulf %3, %4 : vector<64x8xf32>
    %6 = vector.broadcast %1 : vector<1x8xf32> to vector<64x8xf32>
    %7 = arith.addf %5, %6 : vector<64x8xf32>
    %cst = arith.constant 0.000000e+00 : f32
    %8 = vector.broadcast %cst : f32 to vector<64x8xf32>
    %9 = arith.maximumf %7, %8 : vector<64x8xf32>
    %10 = arith.truncf %9 : vector<64x8xf32> to vector<64x8xbf16>
    %c0_4 = arith.constant 0 : index
    %c0_5 = arith.constant 0 : index
    %11 = vector.load %arg3[%c0_4, %c0_5] : memref<64x8xbf16, #tpu.memory_space<vmem>>, vector<64x8xbf16>
    tpu.vector_store %arg3[%c0_4, %c0_5], %10 {strides = array<i32>} : memref<64x8xbf16, #tpu.memory_space<vmem>>, vector<64x8xbf16>,
    return
  }
  func.func @transform_0(%arg0: i32) -> (i32, i32) {
    %c0_i32 = arith.constant 0 : i32
    %c0_i32_0 = arith.constant 0 : i32
    %c0_i32_1 = arith.constant 0 : i32
    return %c0_i32, %c0_i32_0 : i32, i32
  }
  func.func @transform_1(%arg0: i32) -> (i32, i32) {
    %c0_i32 = arith.constant 0 : i32
    %c0_i32_0 = arith.constant 0 : i32
    return %arg0, %c0_i32 : i32, i32
  }
  func.func @transform_2(%arg0: i32) -> (i32, i32) {
    %c0_i32 = arith.constant 0 : i32
    %c0_i32_0 = arith.constant 0 : i32
    return %arg0, %c0_i32 : i32, i32
  }
}

module attributes {stable_mosaic.version = 11 : i64} {
  func.func @_bn_relu_apply_kernel(%arg0: i32, %arg1: memref<2x8xf32, #tpu.memory_space<vmem>>, %arg2: memref<64x8xbf16, #tpu.memory_space<vmem>>, %arg3: memref<64x8xf32, #tpu.memory_space<vmem>>) attributes {dimension_semantics = [#tpu.dimension_semantics<parallel>], iteration_bounds = array<i64: 2>, scalar_prefetch = 0 : i64, scratch_operands = 0 : i64, tpu.core_type = #tpu.core_type<tc>, window_params = [{pipeline_mode = #tpu.pipeline_mode<synchronous>, transform_indices = @transform_0, window_bounds = array<i64: 2, 8>}, {transform_indices = @transform_1, window_bounds = array<i64: 64, 8>}, {transform_indices = @transform_2, window_bounds = array<i64: 64, 8>}]} {
    %c0 = arith.constant 0 : index
    %c0_0 = arith.constant 0 : index
    %0 = vector.load %arg1[%c0, %c0_0] : memref<2x8xf32, #tpu.memory_space<vmem>>, vector<1x8xf32>
    %c1 = arith.constant 1 : index
    %c0_1 = arith.constant 0 : index
    %1 = vector.load %arg1[%c1, %c0_1] : memref<2x8xf32, #tpu.memory_space<vmem>>, vector<1x8xf32>
    %c0_2 = arith.constant 0 : index
    %c0_3 = arith.constant 0 : index
    %2 = vector.load %arg2[%c0_2, %c0_3] : memref<64x8xbf16, #tpu.memory_space<vmem>>, vector<64x8xbf16>
    %3 = arith.extf %2 : vector<64x8xbf16> to vector<64x8xf32>
    %4 = vector.broadcast %0 : vector<1x8xf32> to vector<64x8xf32>
    %5 = arith.mulf %3, %4 : vector<64x8xf32>
    %6 = vector.broadcast %1 : vector<1x8xf32> to vector<64x8xf32>
    %7 = arith.addf %5, %6 : vector<64x8xf32>
    %cst = arith.constant 0.000000e+00 : f32
    %8 = vector.broadcast %cst : f32 to vector<64x8xf32>
    %9 = arith.maximumf %7, %8 : vector<64x8xf32>
    %c0_4 = arith.constant 0 : index
    %c0_5 = arith.constant 0 : index
    %10 = vector.load %arg3[%c0_4, %c0_5] : memref<64x8xf32, #tpu.memory_space<vmem>>, vector<64x8xf32>
    tpu.vector_store %arg3[%c0_4, %c0_5], %9 {strides = array<i32>} : memref<64x8xf32, #tpu.memory_space<vmem>>, vector<64x8xf32>,
    return
  }
  func.func @transform_0(%arg0: i32) -> (i32, i32) {
    %c0_i32 = arith.constant 0 : i32
    %c0_i32_0 = arith.constant 0 : i32
    %c0_i32_1 = arith.constant 0 : i32
    return %c0_i32, %c0_i32_0 : i32, i32
  }
  func.func @transform_1(%arg0: i32) -> (i32, i32) {
    %c0_i32 = arith.constant 0 : i32
    %c0_i32_0 = arith.constant 0 : i32
    return %arg0, %c0_i32 : i32, i32
  }
  func.func @transform_2(%arg0: i32) -> (i32, i32) {
    %c0_i32 = arith.constant 0 : i32
    %c0_i32_0 = arith.constant 0 : i32
    return %arg0, %c0_i32 : i32, i32
  }
}

module attributes {stable_mosaic.version = 11 : i64} {
  func.func @_matmul_stats_kernel(%arg0: i32, %arg1: memref<64x72xbf16, #tpu.memory_space<vmem>>, %arg2: memref<72x8xbf16, #tpu.memory_space<vmem>>, %arg3: memref<1x8xf32, #tpu.memory_space<vmem>>, %arg4: memref<1x8xf32, #tpu.memory_space<vmem>>, %arg5: memref<64x8xbf16, #tpu.memory_space<vmem>>, %arg6: memref<2x8xf32, #tpu.memory_space<vmem>>, %arg7: memref<8x8xf32, #tpu.memory_space<vmem>>, %arg8: memref<8x8xf32, #tpu.memory_space<vmem>>) attributes {dimension_semantics = [#tpu.dimension_semantics<arbitrary>], iteration_bounds = array<i64: 2>, scalar_prefetch = 0 : i64, scratch_operands = 2 : i64, tpu.core_type = #tpu.core_type<tc>, window_params = [{transform_indices = @transform_0, window_bounds = array<i64: 64, 72>}, {pipeline_mode = #tpu.pipeline_mode<synchronous>, transform_indices = @transform_1, window_bounds = array<i64: 72, 8>}, {pipeline_mode = #tpu.pipeline_mode<synchronous>, transform_indices = @transform_2, window_bounds = array<i64: 1, 8>}, {pipeline_mode = #tpu.pipeline_mode<synchronous>, transform_indices = @transform_3, window_bounds = array<i64: 1, 8>}, {transform_indices = @transform_4, window_bounds = array<i64: 64, 8>}, {pipeline_mode = #tpu.pipeline_mode<synchronous>, transform_indices = @transform_5, window_bounds = array<i64: 2, 8>}]} {
    %c0 = arith.constant 0 : index
    %c0_0 = arith.constant 0 : index
    %0 = vector.load %arg1[%c0, %c0_0] : memref<64x72xbf16, #tpu.memory_space<vmem>>, vector<64x72xbf16>
    %c0_1 = arith.constant 0 : index
    %c0_2 = arith.constant 0 : index
    %1 = vector.load %arg2[%c0_1, %c0_2] : memref<72x8xbf16, #tpu.memory_space<vmem>>, vector<72x8xbf16>
    %cst = arith.constant dense<0.000000e+00> : vector<64x8xf32>
    %2 = tpu.matmul %0, %1, %cst {dimension_numbers = #tpu.dot_dimension_numbers<[1], [0], [0], [1], [0, 0, 1, 1], [], []>} : vector<64x72xbf16>, vector<72x8xbf16>, vector<64x8xf32> -> vector<64x8xf32>
    %3 = arith.truncf %2 : vector<64x8xf32> to vector<64x8xbf16>
    %c0_3 = arith.constant 0 : index
    %c0_4 = arith.constant 0 : index
    %4 = vector.load %arg5[%c0_3, %c0_4] : memref<64x8xbf16, #tpu.memory_space<vmem>>, vector<64x8xbf16>
    tpu.vector_store %arg5[%c0_3, %c0_4], %3 {strides = array<i32>} : memref<64x8xbf16, #tpu.memory_space<vmem>>, vector<64x8xbf16>,
    %c0_i32 = arith.constant 0 : i32
    %5 = arith.cmpi eq, %arg0, %c0_i32 : i32
    %6 = arith.extui %5 : i1 to i32
    %c0_i32_5 = arith.constant 0 : i32
    %7 = arith.cmpi ne, %6, %c0_i32_5 : i32
    scf.if %7 {
      %cst_17 = arith.constant 0.000000e+00 : f32
      %21 = vector.broadcast %cst_17 : f32 to vector<8x8xf32>
      %c0_18 = arith.constant 0 : index
      %c0_19 = arith.constant 0 : index
      %22 = vector.load %arg7[%c0_18, %c0_19] : memref<8x8xf32, #tpu.memory_space<vmem>>, vector<8x8xf32>
      tpu.vector_store %arg7[%c0_18, %c0_19], %21 {strides = array<i32>} : memref<8x8xf32, #tpu.memory_space<vmem>>, vector<8x8xf32>,
      %cst_20 = arith.constant 0.000000e+00 : f32
      %23 = vector.broadcast %cst_20 : f32 to vector<8x8xf32>
      %c0_21 = arith.constant 0 : index
      %c0_22 = arith.constant 0 : index
      %24 = vector.load %arg8[%c0_21, %c0_22] : memref<8x8xf32, #tpu.memory_space<vmem>>, vector<8x8xf32>
      tpu.vector_store %arg8[%c0_21, %c0_22], %23 {strides = array<i32>} : memref<8x8xf32, #tpu.memory_space<vmem>>, vector<8x8xf32>,
    } else {
    }
    %8 = vector.shape_cast %2 : vector<64x8xf32> to vector<8x8x8xf32>
    %c0_6 = arith.constant 0 : index
    %c0_7 = arith.constant 0 : index
    %9 = vector.load %arg7[%c0_6, %c0_7] : memref<8x8xf32, #tpu.memory_space<vmem>>, vector<8x8xf32>
    %cst_8 = arith.constant dense<0.000000e+00> : vector<8x8xf32>
    %10 = vector.multi_reduction <add>, %8, %cst_8 [0] : vector<8x8x8xf32> to vector<8x8xf32>
    %11 = arith.addf %9, %10 : vector<8x8xf32>
    %c0_9 = arith.constant 0 : index
    %c0_10 = arith.constant 0 : index
    %12 = vector.load %arg7[%c0_9, %c0_10] : memref<8x8xf32, #tpu.memory_space<vmem>>, vector<8x8xf32>
    tpu.vector_store %arg7[%c0_9, %c0_10], %11 {strides = array<i32>} : memref<8x8xf32, #tpu.memory_space<vmem>>, vector<8x8xf32>,
    %c0_11 = arith.constant 0 : index
    %c0_12 = arith.constant 0 : index
    %13 = vector.load %arg8[%c0_11, %c0_12] : memref<8x8xf32, #tpu.memory_space<vmem>>, vector<8x8xf32>
    %14 = arith.mulf %8, %8 : vector<8x8x8xf32>
    %cst_13 = arith.constant dense<0.000000e+00> : vector<8x8xf32>
    %15 = vector.multi_reduction <add>, %14, %cst_13 [0] : vector<8x8x8xf32> to vector<8x8xf32>
    %16 = arith.addf %13, %15 : vector<8x8xf32>
    %c0_14 = arith.constant 0 : index
    %c0_15 = arith.constant 0 : index
    %17 = vector.load %arg8[%c0_14, %c0_15] : memref<8x8xf32, #tpu.memory_space<vmem>>, vector<8x8xf32>
    tpu.vector_store %arg8[%c0_14, %c0_15], %16 {strides = array<i32>} : memref<8x8xf32, #tpu.memory_space<vmem>>, vector<8x8xf32>,
    %c1_i32 = arith.constant 1 : i32
    %18 = arith.cmpi eq, %arg0, %c1_i32 : i32
    %19 = arith.extui %18 : i1 to i32
    %c0_i32_16 = arith.constant 0 : i32
    %20 = arith.cmpi ne, %19, %c0_i32_16 : i32
    scf.if %20 {
      %c0_17 = arith.constant 0 : index
      %c0_18 = arith.constant 0 : index
      %21 = vector.load %arg7[%c0_17, %c0_18] : memref<8x8xf32, #tpu.memory_space<vmem>>, vector<8x8xf32>
      %cst_19 = arith.constant dense<0.000000e+00> : vector<8xf32>
      %22 = vector.multi_reduction <add>, %21, %cst_19 [0] : vector<8x8xf32> to vector<8xf32>
      %23 = vector.shape_cast %22 : vector<8xf32> to vector<1x8xf32>
      %cst_20 = arith.constant 7.812500e-03 : f32
      %24 = vector.broadcast %cst_20 : f32 to vector<1x8xf32>
      %25 = arith.mulf %23, %24 : vector<1x8xf32>
      %c0_21 = arith.constant 0 : index
      %c0_22 = arith.constant 0 : index
      %26 = vector.load %arg8[%c0_21, %c0_22] : memref<8x8xf32, #tpu.memory_space<vmem>>, vector<8x8xf32>
      %cst_23 = arith.constant dense<0.000000e+00> : vector<8xf32>
      %27 = vector.multi_reduction <add>, %26, %cst_23 [0] : vector<8x8xf32> to vector<8xf32>
      %28 = vector.shape_cast %27 : vector<8xf32> to vector<1x8xf32>
      %cst_24 = arith.constant 7.812500e-03 : f32
      %29 = vector.broadcast %cst_24 : f32 to vector<1x8xf32>
      %30 = arith.mulf %28, %29 : vector<1x8xf32>
      %31 = arith.mulf %25, %25 : vector<1x8xf32>
      %32 = arith.subf %30, %31 : vector<1x8xf32>
      %cst_25 = arith.constant 0.000000e+00 : f32
      %33 = vector.broadcast %cst_25 : f32 to vector<1x8xf32>
      %34 = arith.maximumf %32, %33 : vector<1x8xf32>
      %c0_26 = arith.constant 0 : index
      %c0_27 = arith.constant 0 : index
      %35 = vector.load %arg3[%c0_26, %c0_27] : memref<1x8xf32, #tpu.memory_space<vmem>>, vector<1x8xf32>
      %cst_28 = arith.constant 9.99999974E-6 : f32
      %36 = vector.broadcast %cst_28 : f32 to vector<1x8xf32>
      %37 = arith.addf %34, %36 : vector<1x8xf32>
      %38 = math.rsqrt %37 : vector<1x8xf32>
      %39 = arith.mulf %35, %38 : vector<1x8xf32>
      %c0_29 = arith.constant 0 : index
      %c0_30 = arith.constant 0 : index
      %40 = vector.load %arg4[%c0_29, %c0_30] : memref<1x8xf32, #tpu.memory_space<vmem>>, vector<1x8xf32>
      %41 = arith.mulf %25, %39 : vector<1x8xf32>
      %42 = arith.subf %40, %41 : vector<1x8xf32>
      %c0_31 = arith.constant 0 : index
      %c0_32 = arith.constant 0 : index
      %43 = vector.load %arg6[%c0_31, %c0_32] : memref<2x8xf32, #tpu.memory_space<vmem>>, vector<1x8xf32>
      tpu.vector_store %arg6[%c0_31, %c0_32], %39 {strides = array<i32>} : memref<2x8xf32, #tpu.memory_space<vmem>>, vector<1x8xf32>,
      %c1 = arith.constant 1 : index
      %c0_33 = arith.constant 0 : index
      %44 = vector.load %arg6[%c1, %c0_33] : memref<2x8xf32, #tpu.memory_space<vmem>>, vector<1x8xf32>
      tpu.vector_store %arg6[%c1, %c0_33], %42 {strides = array<i32>} : memref<2x8xf32, #tpu.memory_space<vmem>>, vector<1x8xf32>,
    } else {
    }
    return
  }
  func.func @transform_0(%arg0: i32) -> (i32, i32) {
    %c0_i32 = arith.constant 0 : i32
    %c0_i32_0 = arith.constant 0 : i32
    return %arg0, %c0_i32 : i32, i32
  }
  func.func @transform_1(%arg0: i32) -> (i32, i32) {
    %c0_i32 = arith.constant 0 : i32
    %c0_i32_0 = arith.constant 0 : i32
    %c0_i32_1 = arith.constant 0 : i32
    return %c0_i32, %c0_i32_0 : i32, i32
  }
  func.func @transform_2(%arg0: i32) -> (i32, i32) {
    %c0_i32 = arith.constant 0 : i32
    %c0_i32_0 = arith.constant 0 : i32
    %c0_i32_1 = arith.constant 0 : i32
    return %c0_i32, %c0_i32_0 : i32, i32
  }
  func.func @transform_3(%arg0: i32) -> (i32, i32) {
    %c0_i32 = arith.constant 0 : i32
    %c0_i32_0 = arith.constant 0 : i32
    %c0_i32_1 = arith.constant 0 : i32
    return %c0_i32, %c0_i32_0 : i32, i32
  }
  func.func @transform_4(%arg0: i32) -> (i32, i32) {
    %c0_i32 = arith.constant 0 : i32
    %c0_i32_0 = arith.constant 0 : i32
    return %arg0, %c0_i32 : i32, i32
  }
  func.func @transform_5(%arg0: i32) -> (i32, i32) {
    %c0_i32 = arith.constant 0 : i32
    %c0_i32_0 = arith.constant 0 : i32
    %c0_i32_1 = arith.constant 0 : i32
    return %c0_i32, %c0_i32_0 : i32, i32
  }
}

</mosaic_0001>

<llo_original>
// kernel: resnet_block_forward.5
$region0: #{resnet_block_forward.5}
  #allocation0 [shape = 'u32[]', space=smem, size = 0x4, offset = 0x4, fixed_abs, tag = 'smem constant byte address 0x4 - core index']
  #allocation1 [shape = 'u32[144,128]{1,0:T(1,128)}', space=vmem, size = 0x12000, scoped, tag = 'internal scratch']
  %s0 = inlined_call_operand.vmem [shape: f32[2,8], index: 0, kind: input, shape index: {}]
  %s1 = inlined_call_operand.vmem [shape: bf16[128,8], index: 1, kind: input, shape index: {}]
  %s2 = inlined_call_operand.vmem [shape: bf16[128,8], index: 2, kind: output, shape index: {}]
  %s3 = sld [smem:[#allocation0]]
  $region41: #{resnet_block_forward.5} parent=0
    _
  %s5 = ssub.s32 1, %s3
  %s6 = scalar_select 0, %s5, %s3
  loop: start=0, step=1, limit=4
  $region2: #{resnet_block_forward.5} parent=0 // loop_pre_header
    _
  $region3: #{resnet_block_forward.5} parent=0 // loop_header
    %s8 = sphi 0, %s12
    %p9 = scmp.ge.s32.totalorder %s8, 4
    %s16 = sphi 0, %s16
    %s18 = sphi 0, %s16
    %s19 = sphi 0, %s18
    %s33 = sphi 0, %s19
    %s39 = sphi 0, %s41
    %s42 = sphi 0, %s39
    %s43 = sphi 0, %s42
    %s59 = sphi 0, %s43
    %s65 = sphi 0, %s67
    %s68 = sphi 0, %s65
    %s69 = sphi 0, %s68
    %s85 = sphi 0, %s69
  $region4: #{resnet_block_forward.5} parent=0 // loop_header_branch
    %11 = sbr.rel (%p9) target = $region8
  $region5: #{resnet_block_forward.5} parent=0 // loop_body
    %s13 = ssub.s32 %s8, 1
    %s14 = ssub.s32 %s8, 2
    %s15 = sadd.s32 %s8, 1
    %s17 = sadd.s32 %s16, 1
    %p20 = scmp.eq.s32.totalorder %s8, 1
    %p21 = scmp.ne.s32.totalorder %s16, %s18
    %p22 = scmp.eq.s32.totalorder %s8, 0
    %p23 = por %p21, %p22
    %p24 = scmp.ne.s32.totalorder %s16, %s18
    %p25 = scmp.eq.s32.totalorder %s13, 1
    %p26 = por %p24, %p25
    %p27 = scmp.ne.s32.totalorder %s18, %s19
    %p28 = scmp.eq.s32.totalorder %s13, 0
    %p29 = por %p27, %p28
    %p30 = scmp.ne.s32.totalorder %s18, %s19
    %p31 = scmp.eq.s32.totalorder %s14, 1
    %p32 = por %p30, %p31
    %p34 = scmp.ne.s32.totalorder %s19, %s33
    %p35 = scmp.eq.s32.totalorder %s14, 0
    %p36 = por %p34, %p35
    %s37 = ssub.s32 %s8, %s15
    %p38 = scmp.eq.s32.totalorder %s37, 0
    %s40 = sadd.s32 %s39, 1
    %s41 = scalar_select %p38, %s39, %s40
    %p44 = pneg %p38
    %p45 = scmp.eq.s32.totalorder %s8, 1
    %p46 = por %p44, %p45
    %p47 = scmp.ne.s32.totalorder %s39, %s42
    %p48 = scmp.eq.s32.totalorder %s8, 0
    %p49 = por %p47, %p48
    %p50 = scmp.ne.s32.totalorder %s39, %s42
    %p51 = scmp.eq.s32.totalorder %s13, 1
    %p52 = por %p50, %p51
    %p53 = scmp.ne.s32.totalorder %s42, %s43
    %p54 = scmp.eq.s32.totalorder %s13, 0
    %p55 = por %p53, %p54
    %p56 = scmp.ne.s32.totalorder %s42, %s43
    %p57 = scmp.eq.s32.totalorder %s14, 1
    %p58 = por %p56, %p57
    %p60 = scmp.ne.s32.totalorder %s43, %s59
    %p61 = scmp.eq.s32.totalorder %s14, 0
    %p62 = por %p60, %p61
    %s63 = ssub.s32 %s8, %s15
    %p64 = scmp.eq.s32.totalorder %s63, 0
    %s66 = sadd.s32 %s65, 1
    %s67 = scalar_select %p64, %s65, %s66
    %p70 = pneg %p64
    %p71 = scmp.eq.s32.totalorder %s8, 1
    %p72 = por %p70, %p71
    %p73 = scmp.ne.s32.totalorder %s65, %s68
    %p74 = scmp.eq.s32.totalorder %s8, 0
    %p75 = por %p73, %p74
    %p76 = scmp.ne.s32.totalorder %s65, %s68
    %p77 = scmp.eq.s32.totalorder %s13, 1
    %p78 = por %p76, %p77
    %p79 = scmp.ne.s32.totalorder %s68, %s69
    %p80 = scmp.eq.s32.totalorder %s13, 0
    %p81 = por %p79, %p80
    %p82 = scmp.ne.s32.totalorder %s68, %s69
    %p83 = scmp.eq.s32.totalorder %s14, 1
    %p84 = por %p82, %p83
    %p86 = scmp.ne.s32.totalorder %s69, %s85
    %p87 = scmp.eq.s32.totalorder %s14, 0
    %p88 = por %p86, %p87
    %p89 = scmp.le.s32.totalorder 1, %s8
    %p90 = scmp.lt.s32.totalorder %s8, 3
    %p91 = pnand %p89, %p90
    %p92 = pneg %p91
    // Predicated region
    $region9: #{resnet_block_forward.5} parent=5 // pred_check
      _
    $region10: #{resnet_block_forward.5} parent=5 // pred_check_branch
      %94 = sbr.rel (%p91) target = $region12
    $region11: #{resnet_block_forward.5} parent=5 // pred_region
      %s95 = ssub.s32 %s8, 1
      // Predicated region
      $region13: #{resnet_block_forward.5} parent=11 // pred_check
        %p96 = pneg %p29
      $region14: #{resnet_block_forward.5} parent=11 // pred_check_branch
        %98 = sbr.rel (%p96) target = $region16
      $region15: #{resnet_block_forward.5} parent=11 // pred_region
        _
      $region16: #{resnet_block_forward.5} parent=11 // pred_fallthru
        _
    $region12: #{resnet_block_forward.5} parent=5 // pred_fallthru
      _
    %p99 = scmp.lt.s32.totalorder %s8, 2
    // Predicated region
    $region17: #{resnet_block_forward.5} parent=5 // pred_check
      %p100 = pneg %p99
    $region18: #{resnet_block_forward.5} parent=5 // pred_check_branch
      %102 = sbr.rel (%p100) target = $region20
    $region19: #{resnet_block_forward.5} parent=5 // pred_region
      // Predicated region
      $region21: #{resnet_block_forward.5} parent=19 // pred_check
        %p103 = pneg %p49
      $region22: #{resnet_block_forward.5} parent=19 // pred_check_branch
        %105 = sbr.rel (%p103) target = $region24
      $region23: #{resnet_block_forward.5} parent=19 // pred_region
        %s106 = smul.u32 8, %s8
        %p107 = scmp.lt.s32.totalorder %s106, 15
        %s108 = scalar_select %p107, %s106, 15
        %s109 = smul.addr %s108, 4
        %s110 = scalar_lea.vmem %s1, %s109
        %s111 = smul.u32 8, %s8
      $region24: #{resnet_block_forward.5} parent=19 // pred_fallthru
        _
    $region20: #{resnet_block_forward.5} parent=5 // pred_fallthru
      _
    %p112 = scmp.le.s32.totalorder 1, %s8
    %p113 = scmp.lt.s32.totalorder %s8, 3
    %p114 = pnand %p112, %p113
    %p115 = pneg %p114
    // Predicated region
    $region25: #{resnet_block_forward.5} parent=5 // pred_check
      _
    $region26: #{resnet_block_forward.5} parent=5 // pred_check_branch
      %117 = sbr.rel (%p114) target = $region28
    $region27: #{resnet_block_forward.5} parent=5 // pred_region
      %s118 = ssub.s32 %s8, 1
      %p119 = pneg %p29
      %p120 = pneg %p26
      %s121 = smul.u32 8, %s13
      %p122 = scmp.lt.s32.totalorder %s121, 15
      %s123 = scalar_select %p122, %s121, 15
      %s124 = smul.addr %s123, 4
      %s125 = scalar_lea.vmem %s1, %s124
      %p126 = pneg %p55
      %p127 = pneg %p52
      %p128 = pneg %p81
      %p129 = pneg %p78
      %s130 = smul.u32 8, %s13
      %p131 = scmp.lt.s32.totalorder %s130, 15
      %s132 = scalar_select %p131, %s130, 15
      %s133 = smul.addr %s132, 4
      %s134 = scalar_lea.vmem %s2, %s133
      %s135 = smul.u32 8, %s13
      %p136 = scmp.lt.s32.totalorder %s135, 15
      %s137 = scalar_select %p136, %s135, 15
      %s138 = smul.addr %s137, 4
      %s139 = scalar_lea.vmem %s1, %s138
      %s140 = smul.u32 8, %s13
      %s141 = smul.u32 8, %s13
      %p142 = scmp.lt.s32.totalorder %s141, 15
      %s143 = scalar_select %p142, %s141, 15
      %s144 = smul.addr %s143, 4
      %s145 = scalar_lea.vmem %s2, %s144
      %s146 = smul.u32 8, %s13
      %v147 = vld [vmem:[%s0] sm:$0x1]
      %v148 = vld [vmem:[%s0 + $0x1] sm:$0x1]
      %v149 = vld [vmem:[%s139] sm:$0xf]
      %v150 = vld [vmem:[%s139 + $0x4] sm:$0xf]
      %v151 = vld [vmem:[%s139 + $0x8] sm:$0xf]
      %v152 = vld [vmem:[%s139 + $0xc] sm:$0xf]
      %v153 = vld [vmem:[%s139 + $0x10] sm:$0xf]
      %v154 = vld [vmem:[%s139 + $0x14] sm:$0xf]
      %v155 = vld [vmem:[%s139 + $0x18] sm:$0xf]
      %v156 = vld [vmem:[%s139 + $0x1c] sm:$0xf]
      %v157 = vunpack.c.l.bf16 %v149
      %v158 = vunpack.c.l.bf16 %v150
      %v159 = vunpack.c.l.bf16 %v151
      %v160 = vunpack.c.l.bf16 %v152
      %v161 = vunpack.c.l.bf16 %v153
      %v162 = vunpack.c.l.bf16 %v154
      %v163 = vunpack.c.l.bf16 %v155
      %v164 = vunpack.c.l.bf16 %v156
      %v165 = vlaneseq
      %v166 = vshrl.u32 %v165, 7
      %v167 = vsub.s32 0, %v166
      %v168 = vrot.slane %v147, %v167
      %v169 = vmul.f32 %v157, %v168
      %v170 = vmul.f32 %v158, %v168
      %v171 = vmul.f32 %v159, %v168
      %v172 = vmul.f32 %v160, %v168
      %v173 = vmul.f32 %v161, %v168
      %v174 = vmul.f32 %v162, %v168
      %v175 = vmul.f32 %v163, %v168
      %v176 = vmul.f32 %v164, %v168
      %v177 = vlaneseq
      %v178 = vshrl.u32 %v177, 7
      %v179 = vsub.s32 0, %v178
      %v180 = vrot.slane %v148, %v179
      %v181 = vadd.f32 %v169, %v180
      %v182 = vadd.f32 %v170, %v180
      %v183 = vadd.f32 %v171, %v180
      %v184 = vadd.f32 %v172, %v180
      %v185 = vadd.f32 %v173, %v180
      %v186 = vadd.f32 %v174, %v180
      %v187 = vadd.f32 %v175, %v180
      %v188 = vadd.f32 %v176, %v180
      %v189 = vmax.f32 %v181, 0.0
      %v190 = vmax.f32 %v182, 0.0
      %v191 = vmax.f32 %v183, 0.0
      %v192 = vmax.f32 %v184, 0.0
      %v193 = vmax.f32 %v185, 0.0
      %v194 = vmax.f32 %v186, 0.0
      %v195 = vmax.f32 %v187, 0.0
      %v196 = vmax.f32 %v188, 0.0
      %v197 = vpack.c.bf16 %v190, %v189
      %v198 = vpack.c.bf16 %v192, %v191
      %v199 = vpack.c.bf16 %v194, %v193
      %v200 = vpack.c.bf16 %v196, %v195
      %v205 = vunpack.c.l.b16 %v197
      %v206 = vunpack.c.h.b16 %v197
      %v207 = vunpack.c.l.b16 %v198
      %v208 = vunpack.c.h.b16 %v198
      %v209 = vunpack.c.l.b16 %v199
      %v210 = vunpack.c.h.b16 %v199
      %v211 = vunpack.c.l.b16 %v200
      %v212 = vunpack.c.h.b16 %v200
      %v213 = vpack.c.b16 %v205, %v205
      %v214 = vpack.c.b16 %v206, %v206
      %v215 = vpack.c.b16 %v207, %v207
      %v216 = vpack.c.b16 %v208, %v208
      %v217 = vpack.c.b16 %v209, %v209
      %v218 = vpack.c.b16 %v210, %v210
      %v219 = vpack.c.b16 %v211, %v211
      %v220 = vpack.c.b16 %v212, %v212
      %vm229 = vcmask 60416
      %230 = vst.msk [vmem:[%s145] sm:$0xf] %vm229, %v213
      %231 = vst.msk [vmem:[%s145 + $0x4] sm:$0xf] %vm229, %v214
      %232 = vst.msk [vmem:[%s145 + $0x8] sm:$0xf] %vm229, %v215
      %233 = vst.msk [vmem:[%s145 + $0xc] sm:$0xf] %vm229, %v216
      %234 = vst.msk [vmem:[%s145 + $0x10] sm:$0xf] %vm229, %v217
      %235 = vst.msk [vmem:[%s145 + $0x14] sm:$0xf] %vm229, %v218
      %236 = vst.msk [vmem:[%s145 + $0x18] sm:$0xf] %vm229, %v219
      %237 = vst.msk [vmem:[%s145 + $0x1c] sm:$0xf] %vm229, %v220
      %s238 = smul.u32 8, %s13
      %p239 = scmp.lt.s32.totalorder %s238, 15
      %s240 = scalar_select %p239, %s238, 15
      %s241 = smul.addr %s240, 4
      %s242 = scalar_lea.vmem %s2, %s241
      // Predicated region
      $region29: #{resnet_block_forward.5} parent=27 // pred_check
        %p243 = pneg %p78
      $region30: #{resnet_block_forward.5} parent=27 // pred_check_branch
        %245 = sbr.rel (%p243) target = $region32
      $region31: #{resnet_block_forward.5} parent=27 // pred_region
        %s246 = smul.u32 8, %s13
      $region32: #{resnet_block_forward.5} parent=27 // pred_fallthru
        _
    $region28: #{resnet_block_forward.5} parent=5 // pred_fallthru
      _
    %p247 = scmp.le.s32.totalorder 2, %s8
    // Predicated region
    $region33: #{resnet_block_forward.5} parent=5 // pred_check
      %p248 = pneg %p247
    $region34: #{resnet_block_forward.5} parent=5 // pred_check_branch
      %250 = sbr.rel (%p248) target = $region36
    $region35: #{resnet_block_forward.5} parent=5 // pred_region
      %s251 = ssub.s32 %s8, 2
      // Predicated region
      $region37: #{resnet_block_forward.5} parent=35 // pred_check
        %p252 = pneg %p84
      $region38: #{resnet_block_forward.5} parent=35 // pred_check_branch
        %254 = sbr.rel (%p252) target = $region40
      $region39: #{resnet_block_forward.5} parent=35 // pred_region
        %s255 = smul.u32 8, %s14
        %p256 = scmp.lt.s32.totalorder %s255, 15
        %s257 = scalar_select %p256, %s255, 15
        %s258 = smul.addr %s257, 4
        %s259 = scalar_lea.vmem %s2, %s258
      $region40: #{resnet_block_forward.5} parent=35 // pred_fallthru
        _
    $region36: #{resnet_block_forward.5} parent=5 // pred_fallthru
      _
  $region6: #{resnet_block_forward.5} parent=0 // loop_footer
    %s12 = sadd.s32 1, %s8
  $region7: #{resnet_block_forward.5} parent=0 // loop_footer_branch
    %7 = sbr.rel target = $region3
  $region8: #{resnet_block_forward.5} parent=0 // loop_exit
    _

// kernel: resnet_block_forward.4
$region0: #{resnet_block_forward.4}
  #allocation0 [shape = 'u32[]', space=smem, size = 0x4, offset = 0x4, fixed_abs, tag = 'smem constant byte address 0x4 - core index']
  #allocation1 [shape = 'u32[144,128]{1,0:T(1,128)}', space=vmem, size = 0x12000, scoped, tag = 'internal scratch']
  #allocation2 [shape = 'f32[8,8]{1,0:T(8,128)}', space=vmem, size = 0x1000, scoped, tag = 'scratch operand']
  #allocation3 [shape = 'f32[8,8]{1,0:T(8,128)}', space=vmem, size = 0x1000, scoped, tag = 'scratch operand']
  %s0 = inlined_call_operand.vmem [shape: bf16[128,36], index: 0, kind: input, shape index: {}]
  %s1 = inlined_call_operand.vmem [shape: bf16[36,8], index: 1, kind: input, shape index: {}]
  %s2 = inlined_call_operand.vmem [shape: f32[1,8], index: 2, kind: input, shape index: {}]
  %s3 = inlined_call_operand.vmem [shape: f32[1,8], index: 3, kind: input, shape index: {}]
  %s4 = inlined_call_operand.vmem [shape: bf16[128,8], index: 4, kind: output, shape index: {0}]
  %s5 = inlined_call_operand.vmem [shape: f32[2,8], index: 5, kind: output, shape index: {1}]
  %6 = xla_tuple %s4, %s5
  %s7 = sld [smem:[#allocation0]]
  $region65: #{resnet_block_forward.4} parent=0
    _
  %s9 = ssub.s32 1, %s7
  %s10 = scalar_select 0, %s9, %s7
  loop: start=0, step=1, limit=4
  $region2: #{resnet_block_forward.4} parent=0 // loop_pre_header
    _
  $region3: #{resnet_block_forward.4} parent=0 // loop_header
    %s12 = sphi 0, %s16
    %p13 = scmp.ge.s32.totalorder %s12, 4
    %s22 = sphi 0, %s24
    %s25 = sphi 0, %s22
    %s26 = sphi 0, %s25
    %s42 = sphi 0, %s26
    %s46 = sphi 0, %s46
    %s48 = sphi 0, %s46
    %s49 = sphi 0, %s48
    %s63 = sphi 0, %s49
    %s67 = sphi 0, %s67
    %s69 = sphi 0, %s67
    %s70 = sphi 0, %s69
    %s84 = sphi 0, %s70
    %s88 = sphi 0, %s88
    %s90 = sphi 0, %s88
    %s91 = sphi 0, %s90
    %s105 = sphi 0, %s91
    %s111 = sphi 0, %s113
    %s114 = sphi 0, %s111
    %s115 = sphi 0, %s114
    %s131 = sphi 0, %s115
    %s135 = sphi 0, %s135
    %s137 = sphi 0, %s135
    %s138 = sphi 0, %s137
    %s152 = sphi 0, %s138
  $region4: #{resnet_block_forward.4} parent=0 // loop_header_branch
    %15 = sbr.rel (%p13) target = $region8
  $region5: #{resnet_block_forward.4} parent=0 // loop_body
    %s17 = ssub.s32 %s12, 1
    %s18 = ssub.s32 %s12, 2
    %s19 = sadd.s32 %s12, 1
    %s20 = ssub.s32 %s12, %s19
    %p21 = scmp.eq.s32.totalorder %s20, 0
    %s23 = sadd.s32 %s22, 1
    %s24 = scalar_select %p21, %s22, %s23
    %p27 = pneg %p21
    %p28 = scmp.eq.s32.totalorder %s12, 1
    %p29 = por %p27, %p28
    %p30 = scmp.ne.s32.totalorder %s22, %s25
    %p31 = scmp.eq.s32.totalorder %s12, 0
    %p32 = por %p30, %p31
    %p33 = scmp.ne.s32.totalorder %s22, %s25
    %p34 = scmp.eq.s32.totalorder %s17, 1
    %p35 = por %p33, %p34
    %p36 = scmp.ne.s32.totalorder %s25, %s26
    %p37 = scmp.eq.s32.totalorder %s17, 0
    %p38 = por %p36, %p37
    %p39 = scmp.ne.s32.totalorder %s25, %s26
    %p40 = scmp.eq.s32.totalorder %s18, 1
    %p41 = por %p39, %p40
    %p43 = scmp.ne.s32.totalorder %s26, %s42
    %p44 = scmp.eq.s32.totalorder %s18, 0
    %p45 = por %p43, %p44
    %s47 = sadd.s32 %s46, 1
    %p50 = scmp.eq.s32.totalorder %s12, 1
    %p51 = scmp.ne.s32.totalorder %s46, %s48
    %p52 = scmp.eq.s32.totalorder %s12, 0
    %p53 = por %p51, %p52
    %p54 = scmp.ne.s32.totalorder %s46, %s48
    %p55 = scmp.eq.s32.totalorder %s17, 1
    %p56 = por %p54, %p55
    %p57 = scmp.ne.s32.totalorder %s48, %s49
    %p58 = scmp.eq.s32.totalorder %s17, 0
    %p59 = por %p57, %p58
    %p60 = scmp.ne.s32.totalorder %s48, %s49
    %p61 = scmp.eq.s32.totalorder %s18, 1
    %p62 = por %p60, %p61
    %p64 = scmp.ne.s32.totalorder %s49, %s63
    %p65 = scmp.eq.s32.totalorder %s18, 0
    %p66 = por %p64, %p65
    %s68 = sadd.s32 %s67, 1
    %p71 = scmp.eq.s32.totalorder %s12, 1
    %p72 = scmp.ne.s32.totalorder %s67, %s69
    %p73 = scmp.eq.s32.totalorder %s12, 0
    %p74 = por %p72, %p73
    %p75 = scmp.ne.s32.totalorder %s67, %s69
    %p76 = scmp.eq.s32.totalorder %s17, 1
    %p77 = por %p75, %p76
    %p78 = scmp.ne.s32.totalorder %s69, %s70
    %p79 = scmp.eq.s32.totalorder %s17, 0
    %p80 = por %p78, %p79
    %p81 = scmp.ne.s32.totalorder %s69, %s70
    %p82 = scmp.eq.s32.totalorder %s18, 1
    %p83 = por %p81, %p82
    %p85 = scmp.ne.s32.totalorder %s70, %s84
    %p86 = scmp.eq.s32.totalorder %s18, 0
    %p87 = por %p85, %p86
    %s89 = sadd.s32 %s88, 1
    %p92 = scmp.eq.s32.totalorder %s12, 1
    %p93 = scmp.ne.s32.totalorder %s88, %s90
    %p94 = scmp.eq.s32.totalorder %s12, 0
    %p95 = por %p93, %p94
    %p96 = scmp.ne.s32.totalorder %s88, %s90
    %p97 = scmp.eq.s32.totalorder %s17, 1
    %p98 = por %p96, %p97
    %p99 = scmp.ne.s32.totalorder %s90, %s91
    %p100 = scmp.eq.s32.totalorder %s17, 0
    %p101 = por %p99, %p100
    %p102 = scmp.ne.s32.totalorder %s90, %s91
    %p103 = scmp.eq.s32.totalorder %s18, 1
    %p104 = por %p102, %p103
    %p106 = scmp.ne.s32.totalorder %s91, %s105
    %p107 = scmp.eq.s32.totalorder %s18, 0
    %p108 = por %p106, %p107
    %s109 = ssub.s32 %s12, %s19
    %p110 = scmp.eq.s32.totalorder %s109, 0
    %s112 = sadd.s32 %s111, 1
    %s113 = scalar_select %p110, %s111, %s112
    %p116 = pneg %p110
    %p117 = scmp.eq.s32.totalorder %s12, 1
    %p118 = por %p116, %p117
    %p119 = scmp.ne.s32.totalorder %s111, %s114
    %p120 = scmp.eq.s32.totalorder %s12, 0
    %p121 = por %p119, %p120
    %p122 = scmp.ne.s32.totalorder %s111, %s114
    %p123 = scmp.eq.s32.totalorder %s17, 1
    %p124 = por %p122, %p123
    %p125 = scmp.ne.s32.totalorder %s114, %s115
    %p126 = scmp.eq.s32.totalorder %s17, 0
    %p127 = por %p125, %p126
    %p128 = scmp.ne.s32.totalorder %s114, %s115
    %p129 = scmp.eq.s32.totalorder %s18, 1
    %p130 = por %p128, %p129
    %p132 = scmp.ne.s32.totalorder %s115, %s131
    %p133 = scmp.eq.s32.totalorder %s18, 0
    %p134 = por %p132, %p133
    %s136 = sadd.s32 %s135, 1
    %p139 = scmp.eq.s32.totalorder %s12, 1
    %p140 = scmp.ne.s32.totalorder %s135, %s137
    %p141 = scmp.eq.s32.totalorder %s12, 0
    %p142 = por %p140, %p141
    %p143 = scmp.ne.s32.totalorder %s135, %s137
    %p144 = scmp.eq.s32.totalorder %s17, 1
    %p145 = por %p143, %p144
    %p146 = scmp.ne.s32.totalorder %s137, %s138
    %p147 = scmp.eq.s32.totalorder %s17, 0
    %p148 = por %p146, %p147
    %p149 = scmp.ne.s32.totalorder %s137, %s138
    %p150 = scmp.eq.s32.totalorder %s18, 1
    %p151 = por %p149, %p150
    %p153 = scmp.ne.s32.totalorder %s138, %s152
    %p154 = scmp.eq.s32.totalorder %s18, 0
    %p155 = por %p153, %p154
    %p156 = scmp.le.s32.totalorder 1, %s12
    %p157 = scmp.lt.s32.totalorder %s12, 3
    %p158 = pnand %p156, %p157
    %p159 = pneg %p158
    // Predicated region
    $region9: #{resnet_block_forward.4} parent=5 // pred_check
      _
    $region10: #{resnet_block_forward.4} parent=5 // pred_check_branch
      %161 = sbr.rel (%p158) target = $region12
    $region11: #{resnet_block_forward.4} parent=5 // pred_region
      %s162 = ssub.s32 %s12, 1
      // Predicated region
      $region13: #{resnet_block_forward.4} parent=11 // pred_check
        %p163 = pneg %p59
      $region14: #{resnet_block_forward.4} parent=11 // pred_check_branch
        %165 = sbr.rel (%p163) target = $region16
      $region15: #{resnet_block_forward.4} parent=11 // pred_region
        _
      $region16: #{resnet_block_forward.4} parent=11 // pred_fallthru
        _
      // Predicated region
      $region17: #{resnet_block_forward.4} parent=11 // pred_check
        %p166 = pneg %p80
      $region18: #{resnet_block_forward.4} parent=11 // pred_check_branch
        %168 = sbr.rel (%p166) target = $region20
      $region19: #{resnet_block_forward.4} parent=11 // pred_region
        _
      $region20: #{resnet_block_forward.4} parent=11 // pred_fallthru
        _
      // Predicated region
      $region21: #{resnet_block_forward.4} parent=11 // pred_check
        %p169 = pneg %p101
      $region22: #{resnet_block_forward.4} parent=11 // pred_check_branch
        %171 = sbr.rel (%p169) target = $region24
      $region23: #{resnet_block_forward.4} parent=11 // pred_region
        _
      $region24: #{resnet_block_forward.4} parent=11 // pred_fallthru
        _
    $region12: #{resnet_block_forward.4} parent=5 // pred_fallthru
      _
    %p172 = scmp.lt.s32.totalorder %s12, 2
    // Predicated region
    $region25: #{resnet_block_forward.4} parent=5 // pred_check
      %p173 = pneg %p172
    $region26: #{resnet_block_forward.4} parent=5 // pred_check_branch
      %175 = sbr.rel (%p173) target = $region28
    $region27: #{resnet_block_forward.4} parent=5 // pred_region
      // Predicated region
      $region29: #{resnet_block_forward.4} parent=27 // pred_check
        %p176 = pneg %p32
      $region30: #{resnet_block_forward.4} parent=27 // pred_check_branch
        %178 = sbr.rel (%p176) target = $region32
      $region31: #{resnet_block_forward.4} parent=27 // pred_region
        %s179 = smul.u32 8, %s12
        %p180 = scmp.lt.s32.totalorder %s179, 15
        %s181 = scalar_select %p180, %s179, 15
        %s182 = smul.addr %s181, 4
        %s183 = scalar_lea.vmem %s0, %s182
        %s184 = smul.u32 8, %s12
      $region32: #{resnet_block_forward.4} parent=27 // pred_fallthru
        _
    $region28: #{resnet_block_forward.4} parent=5 // pred_fallthru
      _
    %p185 = scmp.le.s32.totalorder 1, %s12
    %p186 = scmp.lt.s32.totalorder %s12, 3
    %p187 = pnand %p185, %p186
    %p188 = pneg %p187
    // Predicated region
    $region33: #{resnet_block_forward.4} parent=5 // pred_check
      _
    $region34: #{resnet_block_forward.4} parent=5 // pred_check_branch
      %190 = sbr.rel (%p187) target = $region36
    $region35: #{resnet_block_forward.4} parent=5 // pred_region
      %s191 = ssub.s32 %s12, 1
      %s192 = smul.u32 8, %s17
      %p193 = scmp.lt.s32.totalorder %s192, 15
      %s194 = scalar_select %p193, %s192, 15
      %s195 = smul.addr %s194, 4
      %s196 = scalar_lea.vmem %s0, %s195
      %p197 = pneg %p38
      %p198 = pneg %p35
      %p199 = pneg %p59
      %p200 = pneg %p56
      %p201 = pneg %p80
      %p202 = pneg %p77
      %p203 = pneg %p101
      %p204 = pneg %p98
      %p205 = pneg %p127
      %p206 = pneg %p124
      %s207 = smul.u32 8, %s17
      %p208 = scmp.lt.s32.totalorder %s207, 15
      %s209 = scalar_select %p208, %s207, 15
      %s210 = smul.addr %s209, 4
      %s211 = scalar_lea.vmem %s4, %s210
      %p212 = pneg %p148
      %p213 = pneg %p145
      %s214 = smul.u32 8, %s17
      %p215 = scmp.lt.s32.totalorder %s214, 15
      %s216 = scalar_select %p215, %s214, 15
      %s217 = smul.addr %s216, 4
      %s218 = scalar_lea.vmem %s0, %s217
      %s219 = smul.u32 8, %s17
      %s220 = smul.u32 8, %s17
      %p221 = scmp.lt.s32.totalorder %s220, 15
      %s222 = scalar_select %p221, %s220, 15
      %s223 = smul.addr %s222, 4
      %s224 = scalar_lea.vmem %s4, %s223
      %s225 = smul.u32 8, %s17
      %v227 = vld [vmem:[%s218] sm:$0xf]
      %v228 = vld [vmem:[%s218 + $0x4] sm:$0xf]
      %v229 = vld [vmem:[%s218 + $0x8] sm:$0xf]
      %v230 = vld [vmem:[%s218 + $0xc] sm:$0xf]
      %v231 = vld [vmem:[%s218 + $0x10] sm:$0xf]
      %v232 = vld [vmem:[%s218 + $0x14] sm:$0xf]
      %v233 = vld [vmem:[%s218 + $0x18] sm:$0xf]
      %v234 = vld [vmem:[%s218 + $0x1c] sm:$0xf]
      %v235 = vld [vmem:[%s1] sm:$0xf]
      %v236 = vld [vmem:[%s1 + $0x4] sm:$0xf]
      %v237 = vld [vmem:[%s1 + $0x8] sm:$0xf]
      %v238 = vld [vmem:[%s1 + $0xc] sm:$0xf]
      %v239 = vld [vmem:[%s1 + $0x10] sm:$0x3]
      %v248 = vunpack.c.l.b16 %v227
      %v249 = vunpack.c.l.b16 %v228
      %v250 = vunpack.c.l.b16 %v229
      %v251 = vunpack.c.l.b16 %v230
      %v252 = vunpack.c.l.b16 %v231
      %v253 = vunpack.c.l.b16 %v232
      %v254 = vunpack.c.l.b16 %v233
      %v255 = vunpack.c.l.b16 %v234
      %v256 = vpack.c.b16 %v249, %v248
      %v257 = vpack.c.b16 %v251, %v250
      %v258 = vpack.c.b16 %v253, %v252
      %v259 = vpack.c.b16 %v255, %v254
      %v265 = vunpack.c.l.b16 %v235
      %v266 = vunpack.c.l.b16 %v236
      %v267 = vunpack.c.l.b16 %v237
      %v268 = vunpack.c.l.b16 %v238
      %v269 = vunpack.c.l.b16 %v239
      %v270 = vpack.c.b16 %v266, %v265
      %v271 = vpack.c.b16 %v268, %v267
      %v272 = vpack.c.b16 %v269, %v269
      %vm275 = vcmask 293888
      %v277 = vsel %vm275, %v256, 0
      %v280 = vsel %vm275, %v257, 0
      %v283 = vsel %vm275, %v258, 0
      %v286 = vsel %vm275, %v259, 0
      %vm288 = vcmask 1041408
      %v290 = vsel %vm288, %v272, 0
      %292 = vmatprep.subr.bf16.mxu0 0
      %293 = vmatpush1.bf16.msra.mxu0 %v270
      %294 = vmatprep.subr.bf16.mxu0 0
      %295 = vmatpush1.bf16.msra.mxu0 %v271
      %296 = vmatprep.subr.bf16.mxu0 0
      %297 = vmatpush1.bf16.msra.mxu0 %v290
      %298 = vmatprep.subr.bf16.mxu0 0
      %299 = vmatpush1.bf16.msra.mxu0 0
      %300 = vmatprep.subr.bf16.mxu0 0
      %301 = vmatpush1.bf16.msra.mxu0 0
      %302 = vmatprep.subr.bf16.mxu0 0
      %303 = vmatpush1.bf16.msra.mxu0 0
      %304 = vmatprep.subr.bf16.mxu0 0
      %305 = vmatpush1.bf16.msra.mxu0 0
      %306 = vmatprep.subr.bf16.mxu0 0
      %307 = vmatpush1.bf16.msra.mxu0 0
      %308 = vmatprep.subr.bf16.mxu0 0
      %309 = vmatpush1.bf16.msra.mxu0 0
      %310 = vmatprep.subr.bf16.mxu0 0
      %311 = vmatpush1.bf16.msra.mxu0 0
      %312 = vmatprep.subr.bf16.mxu0 0
      %313 = vmatpush1.bf16.msra.mxu0 0
      %314 = vmatprep.subr.bf16.mxu0 0
      %315 = vmatpush1.bf16.msra.mxu0 0
      %316 = vmatprep.subr.bf16.mxu0 0
      %317 = vmatpush1.bf16.msra.mxu0 0
      %318 = vmatprep.subr.bf16.mxu0 0
      %319 = vmatpush1.bf16.msra.mxu0 0
      %320 = vmatprep.subr.bf16.mxu0 0
      %321 = vmatpush1.bf16.msra.mxu0 0
      %322 = vmatprep.subr.bf16.mxu0 0
      %323 = vmatpush1.bf16.msra.mxu0 0
      %324 = vmatprep.mubr.bf16.mxu0 0
      %325 = vmatmul.mubr.bf16.gmra.mrb[0].mxu0 %v277
      %v326 = vpop.f32.mrb[0].mxu0
      %v327 = vadd.f32 0.0, %v326
      %v328 = vpop.f32.mrb[0].mxu0
      %v329 = vpop.f32.mrb[0].mxu0
      %v330 = vadd.f32 0.0, %v329
      %v331 = vpop.f32.mrb[0].mxu0
      %332 = vmatprep.mubr.bf16.mxu0 0
      %333 = vmatmul.mubr.bf16.gmra.mrb[0].mxu0 %v280
      %v334 = vpop.f32.mrb[0].mxu0
      %v335 = vadd.f32 0.0, %v334
      %v336 = vpop.f32.mrb[0].mxu0
      %v337 = vpop.f32.mrb[0].mxu0
      %v338 = vadd.f32 0.0, %v337
      %v339 = vpop.f32.mrb[0].mxu0
      %340 = vmatprep.mubr.bf16.mxu0 0
      %341 = vmatmul.mubr.bf16.gmra.mrb[0].mxu0 %v283
      %v342 = vpop.f32.mrb[0].mxu0
      %v343 = vadd.f32 0.0, %v342
      %v344 = vpop.f32.mrb[0].mxu0
      %v345 = vpop.f32.mrb[0].mxu0
      %v346 = vadd.f32 0.0, %v345
      %v347 = vpop.f32.mrb[0].mxu0
      %348 = vmatprep.mubr.bf16.mxu0 0
      %349 = vmatmul.mubr.bf16.gmra.mrb[0].mxu0 %v286
      %v350 = vpop.f32.mrb[0].mxu0
      %v351 = vadd.f32 0.0, %v350
      %v352 = vpop.f32.mrb[0].mxu0
      %v353 = vpop.f32.mrb[0].mxu0
      %v354 = vadd.f32 0.0, %v353
      %v355 = vpop.f32.mrb[0].mxu0
      %356 = vdwg.mxu0
      %v357 = vpack.c.bf16 %v330, %v327
      %v358 = vpack.c.bf16 %v338, %v335
      %v359 = vpack.c.bf16 %v346, %v343
      %v360 = vpack.c.bf16 %v354, %v351
      %v365 = vunpack.c.l.b16 %v357
      %v366 = vunpack.c.h.b16 %v357
      %v367 = vunpack.c.l.b16 %v358
      %v368 = vunpack.c.h.b16 %v358
      %v369 = vunpack.c.l.b16 %v359
      %v370 = vunpack.c.h.b16 %v359
      %v371 = vunpack.c.l.b16 %v360
      %v372 = vunpack.c.h.b16 %v360
      %v373 = vpack.c.b16 %v365, %v365
      %v374 = vpack.c.b16 %v366, %v366
      %v375 = vpack.c.b16 %v367, %v367
      %v376 = vpack.c.b16 %v368, %v368
      %v377 = vpack.c.b16 %v369, %v369
      %v378 = vpack.c.b16 %v370, %v370
      %v379 = vpack.c.b16 %v371, %v371
      %v380 = vpack.c.b16 %v372, %v372
      %vm389 = vcmask 60416
      %390 = vst.msk [vmem:[%s224] sm:$0xf] %vm389, %v373
      %391 = vst.msk [vmem:[%s224 + $0x4] sm:$0xf] %vm389, %v374
      %392 = vst.msk [vmem:[%s224 + $0x8] sm:$0xf] %vm389, %v375
      %393 = vst.msk [vmem:[%s224 + $0xc] sm:$0xf] %vm389, %v376
      %394 = vst.msk [vmem:[%s224 + $0x10] sm:$0xf] %vm389, %v377
      %395 = vst.msk [vmem:[%s224 + $0x14] sm:$0xf] %vm389, %v378
      %396 = vst.msk [vmem:[%s224 + $0x18] sm:$0xf] %vm389, %v379
      %397 = vst.msk [vmem:[%s224 + $0x1c] sm:$0xf] %vm389, %v380
      %p398 = scmp.eq.s32.totalorder %s17, 0
      // Predicated region
      $region37: #{resnet_block_forward.4} parent=35 // pred_check
        %p399 = pneg %p398
      $region38: #{resnet_block_forward.4} parent=35 // pred_check_branch
        %401 = sbr.rel (%p399) target = $region40
      $region39: #{resnet_block_forward.4} parent=35 // pred_region
        %vm402 = vcmask 64512
        %403 = vst.msk [vmem:[#allocation2] sm:$0xff] %vm402, 0.0
        %404 = vst.msk [vmem:[#allocation3] sm:$0xff] %vm402, 0.0
      $region40: #{resnet_block_forward.4} parent=35 // pred_fallthru
        _
      %v405 = vld [vmem:[#allocation2] sm:$0xff]
      %vm406 = vcmask 64512
      %v407 = vsel %vm406, %v327, 0.0
      %v408 = vsel %vm406, %v330, 0.0
      %v409 = vadd.f32 %v407, %v408
      %v410 = vsel %vm406, %v335, 0.0
      %v411 = vadd.f32 %v409, %v410
      %v412 = vsel %vm406, %v338, 0.0
      %v413 = vadd.f32 %v411, %v412
      %v414 = vsel %vm406, %v343, 0.0
      %v415 = vadd.f32 %v413, %v414
      %v416 = vsel %vm406, %v346, 0.0
      %v417 = vadd.f32 %v415, %v416
      %v418 = vsel %vm406, %v351, 0.0
      %v419 = vadd.f32 %v417, %v418
      %v420 = vsel %vm406, %v354, 0.0
      %v421 = vadd.f32 %v419, %v420
      %v422 = vadd.f32 %v405, %v421
      %423 = vst.msk [vmem:[#allocation2] sm:$0xff] %vm406, %v422
      %v424 = vld [vmem:[#allocation3] sm:$0xff]
      %v425 = vmul.f32 %v327, %v327
      %v426 = vmul.f32 %v330, %v330
      %v427 = vmul.f32 %v335, %v335
      %v428 = vmul.f32 %v338, %v338
      %v429 = vmul.f32 %v343, %v343
      %v430 = vmul.f32 %v346, %v346
      %v431 = vmul.f32 %v351, %v351
      %v432 = vmul.f32 %v354, %v354
      %v433 = vsel %vm406, %v425, 0.0
      %v434 = vsel %vm406, %v426, 0.0
      %v435 = vadd.f32 %v433, %v434
      %v436 = vsel %vm406, %v427, 0.0
      %v437 = vadd.f32 %v435, %v436
      %v438 = vsel %vm406, %v428, 0.0
      %v439 = vadd.f32 %v437, %v438
      %v440 = vsel %vm406, %v429, 0.0
      %v441 = vadd.f32 %v439, %v440
      %v442 = vsel %vm406, %v430, 0.0
      %v443 = vadd.f32 %v441, %v442
      %v444 = vsel %vm406, %v431, 0.0
      %v445 = vadd.f32 %v443, %v444
      %v446 = vsel %vm406, %v432, 0.0
      %v447 = vadd.f32 %v445, %v446
      %v448 = vadd.f32 %v424, %v447
      %449 = vst.msk [vmem:[#allocation3] sm:$0xff] %vm406, %v448
      %p450 = scmp.eq.s32.totalorder %s17, 1
      // Predicated region
      $region41: #{resnet_block_forward.4} parent=35 // pred_check
        %p451 = pneg %p450
      $region42: #{resnet_block_forward.4} parent=35 // pred_check_branch
        %453 = sbr.rel (%p451) target = $region44
      $region43: #{resnet_block_forward.4} parent=35 // pred_region
        %v454 = vld [vmem:[#allocation2] sm:$0xff]
        %v455 = vsel %vm406, %v454, 0.0
        %v456 = vrot.slane %v455, 4
        %v457 = vadd.f32 %v455, %v456
        %v458 = vrot.slane %v457, 2
        %v459 = vadd.f32 %v457, %v458
        %v460 = vrot.slane %v459, 1
        %v461 = vadd.f32 %v459, %v460
        %v462 = vmul.f32 %v461, 0.0078125
        %v463 = vld [vmem:[#allocation3] sm:$0xff]
        %v464 = vsel %vm406, %v463, 0.0
        %v465 = vrot.slane %v464, 4
        %v466 = vadd.f32 %v464, %v465
        %v467 = vrot.slane %v466, 2
        %v468 = vadd.f32 %v466, %v467
        %v469 = vrot.slane %v468, 1
        %v470 = vadd.f32 %v468, %v469
        %v471 = vmul.f32 %v470, 0.0078125
        %v472 = vmul.f32 %v462, %v462
        %v473 = vsub.f32 %v471, %v472
        %v474 = vmax.f32 %v473, 0.0
        %v475 = vld [vmem:[%s2] sm:$0x1]
        %v476 = vadd.f32 %v474, 1e-05
        %v477 = vrsqrt.pop %v476
        %v478 = vmul.f32 %v475, %v477
        %v479 = vld [vmem:[%s3] sm:$0x1]
        %v480 = vmul.f32 %v462, %v478
        %v481 = vsub.f32 %v479, %v480
        %vm482 = vcmask 57344
        %483 = vst.msk [vmem:[%s5] sm:$0x1] %vm482, %v478
        %484 = vst.msk [vmem:[%s5 + $0x1] sm:$0x1] %vm482, %v481
      $region44: #{resnet_block_forward.4} parent=35 // pred_fallthru
        _
      %s485 = smul.u32 8, %s17
      %p486 = scmp.lt.s32.totalorder %s485, 15
      %s487 = scalar_select %p486, %s485, 15
      %s488 = smul.addr %s487, 4
      %s489 = scalar_lea.vmem %s4, %s488
      // Predicated region
      $region45: #{resnet_block_forward.4} parent=35 // pred_check
        %p490 = pneg %p124
      $region46: #{resnet_block_forward.4} parent=35 // pred_check_branch
        %492 = sbr.rel (%p490) target = $region48
      $region47: #{resnet_block_forward.4} parent=35 // pred_region
        %s493 = smul.u32 8, %s17
      $region48: #{resnet_block_forward.4} parent=35 // pred_fallthru
        _
      // Predicated region
      $region49: #{resnet_block_forward.4} parent=35 // pred_check
        %p494 = pneg %p145
      $region50: #{resnet_block_forward.4} parent=35 // pred_check_branch
        %496 = sbr.rel (%p494) target = $region52
      $region51: #{resnet_block_forward.4} parent=35 // pred_region
        _
      $region52: #{resnet_block_forward.4} parent=35 // pred_fallthru
        _
      // Predicated region
      $region53: #{resnet_block_forward.4} parent=35 // pred_check
        %p497 = pneg %p145
      $region54: #{resnet_block_forward.4} parent=35 // pred_check_branch
        %499 = sbr.rel (%p497) target = $region56
      $region55: #{resnet_block_forward.4} parent=35 // pred_region
        _
      $region56: #{resnet_block_forward.4} parent=35 // pred_fallthru
        _
    $region36: #{resnet_block_forward.4} parent=5 // pred_fallthru
      _
    %p500 = scmp.le.s32.totalorder 2, %s12
    // Predicated region
    $region57: #{resnet_block_forward.4} parent=5 // pred_check
      %p501 = pneg %p500
    $region58: #{resnet_block_forward.4} parent=5 // pred_check_branch
      %503 = sbr.rel (%p501) target = $region60
    $region59: #{resnet_block_forward.4} parent=5 // pred_region
      %s504 = ssub.s32 %s12, 2
      // Predicated region
      $region61: #{resnet_block_forward.4} parent=59 // pred_check
        %p505 = pneg %p130
      $region62: #{resnet_block_forward.4} parent=59 // pred_check_branch
        %507 = sbr.rel (%p505) target = $region64
      $region63: #{resnet_block_forward.4} parent=59 // pred_region
        %s508 = smul.u32 8, %s18
        %p509 = scmp.lt.s32.totalorder %s508, 15
        %s510 = scalar_select %p509, %s508, 15
        %s511 = smul.addr %s510, 4
        %s512 = scalar_lea.vmem %s4, %s511
      $region64: #{resnet_block_forward.4} parent=59 // pred_fallthru
        _
    $region60: #{resnet_block_forward.4} parent=5 // pred_fallthru
      _
  $region6: #{resnet_block_forward.4} parent=0 // loop_footer
    %s16 = sadd.s32 1, %s12
  $region7: #{resnet_block_forward.4} parent=0 // loop_footer_branch
    %11 = sbr.rel target = $region3
  $region8: #{resnet_block_forward.4} parent=0 // loop_exit
    _

// kernel: resnet_block_forward.7
$region0: #{resnet_block_forward.7}
  #allocation0 [shape = 'u32[]', space=smem, size = 0x4, offset = 0x4, fixed_abs, tag = 'smem constant byte address 0x4 - core index']
  #allocation1 [shape = 'u32[144,128]{1,0:T(1,128)}', space=vmem, size = 0x12000, scoped, tag = 'internal scratch']
  %s0 = inlined_call_operand.vmem [shape: f32[2,8], index: 0, kind: input, shape index: {}]
  %s1 = inlined_call_operand.vmem [shape: bf16[128,8], index: 1, kind: input, shape index: {}]
  %s2 = inlined_call_operand.vmem [shape: f32[128,8], index: 2, kind: output, shape index: {}]
  %s3 = sld [smem:[#allocation0]]
  $region41: #{resnet_block_forward.7} parent=0
    _
  %s5 = ssub.s32 1, %s3
  %s6 = scalar_select 0, %s5, %s3
  loop: start=0, step=1, limit=4
  $region2: #{resnet_block_forward.7} parent=0 // loop_pre_header
    _
  $region3: #{resnet_block_forward.7} parent=0 // loop_header
    %s8 = sphi 0, %s12
    %p9 = scmp.ge.s32.totalorder %s8, 4
    %s16 = sphi 0, %s16
    %s18 = sphi 0, %s16
    %s19 = sphi 0, %s18
    %s33 = sphi 0, %s19
    %s39 = sphi 0, %s41
    %s42 = sphi 0, %s39
    %s43 = sphi 0, %s42
    %s59 = sphi 0, %s43
    %s65 = sphi 0, %s67
    %s68 = sphi 0, %s65
    %s69 = sphi 0, %s68
    %s85 = sphi 0, %s69
  $region4: #{resnet_block_forward.7} parent=0 // loop_header_branch
    %11 = sbr.rel (%p9) target = $region8
  $region5: #{resnet_block_forward.7} parent=0 // loop_body
    %s13 = ssub.s32 %s8, 1
    %s14 = ssub.s32 %s8, 2
    %s15 = sadd.s32 %s8, 1
    %s17 = sadd.s32 %s16, 1
    %p20 = scmp.eq.s32.totalorder %s8, 1
    %p21 = scmp.ne.s32.totalorder %s16, %s18
    %p22 = scmp.eq.s32.totalorder %s8, 0
    %p23 = por %p21, %p22
    %p24 = scmp.ne.s32.totalorder %s16, %s18
    %p25 = scmp.eq.s32.totalorder %s13, 1
    %p26 = por %p24, %p25
    %p27 = scmp.ne.s32.totalorder %s18, %s19
    %p28 = scmp.eq.s32.totalorder %s13, 0
    %p29 = por %p27, %p28
    %p30 = scmp.ne.s32.totalorder %s18, %s19
    %p31 = scmp.eq.s32.totalorder %s14, 1
    %p32 = por %p30, %p31
    %p34 = scmp.ne.s32.totalorder %s19, %s33
    %p35 = scmp.eq.s32.totalorder %s14, 0
    %p36 = por %p34, %p35
    %s37 = ssub.s32 %s8, %s15
    %p38 = scmp.eq.s32.totalorder %s37, 0
    %s40 = sadd.s32 %s39, 1
    %s41 = scalar_select %p38, %s39, %s40
    %p44 = pneg %p38
    %p45 = scmp.eq.s32.totalorder %s8, 1
    %p46 = por %p44, %p45
    %p47 = scmp.ne.s32.totalorder %s39, %s42
    %p48 = scmp.eq.s32.totalorder %s8, 0
    %p49 = por %p47, %p48
    %p50 = scmp.ne.s32.totalorder %s39, %s42
    %p51 = scmp.eq.s32.totalorder %s13, 1
    %p52 = por %p50, %p51
    %p53 = scmp.ne.s32.totalorder %s42, %s43
    %p54 = scmp.eq.s32.totalorder %s13, 0
    %p55 = por %p53, %p54
    %p56 = scmp.ne.s32.totalorder %s42, %s43
    %p57 = scmp.eq.s32.totalorder %s14, 1
    %p58 = por %p56, %p57
    %p60 = scmp.ne.s32.totalorder %s43, %s59
    %p61 = scmp.eq.s32.totalorder %s14, 0
    %p62 = por %p60, %p61
    %s63 = ssub.s32 %s8, %s15
    %p64 = scmp.eq.s32.totalorder %s63, 0
    %s66 = sadd.s32 %s65, 1
    %s67 = scalar_select %p64, %s65, %s66
    %p70 = pneg %p64
    %p71 = scmp.eq.s32.totalorder %s8, 1
    %p72 = por %p70, %p71
    %p73 = scmp.ne.s32.totalorder %s65, %s68
    %p74 = scmp.eq.s32.totalorder %s8, 0
    %p75 = por %p73, %p74
    %p76 = scmp.ne.s32.totalorder %s65, %s68
    %p77 = scmp.eq.s32.totalorder %s13, 1
    %p78 = por %p76, %p77
    %p79 = scmp.ne.s32.totalorder %s68, %s69
    %p80 = scmp.eq.s32.totalorder %s13, 0
    %p81 = por %p79, %p80
    %p82 = scmp.ne.s32.totalorder %s68, %s69
    %p83 = scmp.eq.s32.totalorder %s14, 1
    %p84 = por %p82, %p83
    %p86 = scmp.ne.s32.totalorder %s69, %s85
    %p87 = scmp.eq.s32.totalorder %s14, 0
    %p88 = por %p86, %p87
    %p89 = scmp.le.s32.totalorder 1, %s8
    %p90 = scmp.lt.s32.totalorder %s8, 3
    %p91 = pnand %p89, %p90
    %p92 = pneg %p91
    // Predicated region
    $region9: #{resnet_block_forward.7} parent=5 // pred_check
      _
    $region10: #{resnet_block_forward.7} parent=5 // pred_check_branch
      %94 = sbr.rel (%p91) target = $region12
    $region11: #{resnet_block_forward.7} parent=5 // pred_region
      %s95 = ssub.s32 %s8, 1
      // Predicated region
      $region13: #{resnet_block_forward.7} parent=11 // pred_check
        %p96 = pneg %p29
      $region14: #{resnet_block_forward.7} parent=11 // pred_check_branch
        %98 = sbr.rel (%p96) target = $region16
      $region15: #{resnet_block_forward.7} parent=11 // pred_region
        _
      $region16: #{resnet_block_forward.7} parent=11 // pred_fallthru
        _
    $region12: #{resnet_block_forward.7} parent=5 // pred_fallthru
      _
    %p99 = scmp.lt.s32.totalorder %s8, 2
    // Predicated region
    $region17: #{resnet_block_forward.7} parent=5 // pred_check
      %p100 = pneg %p99
    $region18: #{resnet_block_forward.7} parent=5 // pred_check_branch
      %102 = sbr.rel (%p100) target = $region20
    $region19: #{resnet_block_forward.7} parent=5 // pred_region
      // Predicated region
      $region21: #{resnet_block_forward.7} parent=19 // pred_check
        %p103 = pneg %p49
      $region22: #{resnet_block_forward.7} parent=19 // pred_check_branch
        %105 = sbr.rel (%p103) target = $region24
      $region23: #{resnet_block_forward.7} parent=19 // pred_region
        %s106 = smul.u32 8, %s8
        %p107 = scmp.lt.s32.totalorder %s106, 15
        %s108 = scalar_select %p107, %s106, 15
        %s109 = smul.addr %s108, 4
        %s110 = scalar_lea.vmem %s1, %s109
        %s111 = smul.u32 8, %s8
      $region24: #{resnet_block_forward.7} parent=19 // pred_fallthru
        _
    $region20: #{resnet_block_forward.7} parent=5 // pred_fallthru
      _
    %p112 = scmp.le.s32.totalorder 1, %s8
    %p113 = scmp.lt.s32.totalorder %s8, 3
    %p114 = pnand %p112, %p113
    %p115 = pneg %p114
    // Predicated region
    $region25: #{resnet_block_forward.7} parent=5 // pred_check
      _
    $region26: #{resnet_block_forward.7} parent=5 // pred_check_branch
      %117 = sbr.rel (%p114) target = $region28
    $region27: #{resnet_block_forward.7} parent=5 // pred_region
      %s118 = ssub.s32 %s8, 1
      %p119 = pneg %p29
      %p120 = pneg %p26
      %s121 = smul.u32 8, %s13
      %p122 = scmp.lt.s32.totalorder %s121, 15
      %s123 = scalar_select %p122, %s121, 15
      %s124 = smul.addr %s123, 4
      %s125 = scalar_lea.vmem %s1, %s124
      %p126 = pneg %p55
      %p127 = pneg %p52
      %p128 = pneg %p81
      %p129 = pneg %p78
      %s130 = smul.u32 8, %s13
      %p131 = scmp.lt.s32.totalorder %s130, 15
      %s132 = scalar_select %p131, %s130, 15
      %s133 = smul.addr %s132, 8
      %s134 = scalar_lea.vmem %s2, %s133
      %s135 = smul.u32 8, %s13
      %p136 = scmp.lt.s32.totalorder %s135, 15
      %s137 = scalar_select %p136, %s135, 15
      %s138 = smul.addr %s137, 4
      %s139 = scalar_lea.vmem %s1, %s138
      %s140 = smul.u32 8, %s13
      %s141 = smul.u32 8, %s13
      %p142 = scmp.lt.s32.totalorder %s141, 15
      %s143 = scalar_select %p142, %s141, 15
      %s144 = smul.addr %s143, 8
      %s145 = scalar_lea.vmem %s2, %s144
      %s146 = smul.u32 8, %s13
      %v147 = vld [vmem:[%s0] sm:$0x1]
      %v148 = vld [vmem:[%s0 + $0x1] sm:$0x1]
      %v149 = vld [vmem:[%s139] sm:$0xf]
      %v150 = vld [vmem:[%s139 + $0x4] sm:$0xf]
      %v151 = vld [vmem:[%s139 + $0x8] sm:$0xf]
      %v152 = vld [vmem:[%s139 + $0xc] sm:$0xf]
      %v153 = vld [vmem:[%s139 + $0x10] sm:$0xf]
      %v154 = vld [vmem:[%s139 + $0x14] sm:$0xf]
      %v155 = vld [vmem:[%s139 + $0x18] sm:$0xf]
      %v156 = vld [vmem:[%s139 + $0x1c] sm:$0xf]
      %v157 = vunpack.c.l.bf16 %v149
      %v158 = vunpack.c.l.bf16 %v150
      %v159 = vunpack.c.l.bf16 %v151
      %v160 = vunpack.c.l.bf16 %v152
      %v161 = vunpack.c.l.bf16 %v153
      %v162 = vunpack.c.l.bf16 %v154
      %v163 = vunpack.c.l.bf16 %v155
      %v164 = vunpack.c.l.bf16 %v156
      %v165 = vlaneseq
      %v166 = vshrl.u32 %v165, 7
      %v167 = vsub.s32 0, %v166
      %v168 = vrot.slane %v147, %v167
      %v169 = vmul.f32 %v157, %v168
      %v170 = vmul.f32 %v158, %v168
      %v171 = vmul.f32 %v159, %v168
      %v172 = vmul.f32 %v160, %v168
      %v173 = vmul.f32 %v161, %v168
      %v174 = vmul.f32 %v162, %v168
      %v175 = vmul.f32 %v163, %v168
      %v176 = vmul.f32 %v164, %v168
      %v177 = vlaneseq
      %v178 = vshrl.u32 %v177, 7
      %v179 = vsub.s32 0, %v178
      %v180 = vrot.slane %v148, %v179
      %v181 = vadd.f32 %v169, %v180
      %v182 = vadd.f32 %v170, %v180
      %v183 = vadd.f32 %v171, %v180
      %v184 = vadd.f32 %v172, %v180
      %v185 = vadd.f32 %v173, %v180
      %v186 = vadd.f32 %v174, %v180
      %v187 = vadd.f32 %v175, %v180
      %v188 = vadd.f32 %v176, %v180
      %v189 = vmax.f32 %v181, 0.0
      %v190 = vmax.f32 %v182, 0.0
      %v191 = vmax.f32 %v183, 0.0
      %v192 = vmax.f32 %v184, 0.0
      %v193 = vmax.f32 %v185, 0.0
      %v194 = vmax.f32 %v186, 0.0
      %v195 = vmax.f32 %v187, 0.0
      %v196 = vmax.f32 %v188, 0.0
      %vm197 = vcmask 64512
      %198 = vst.msk [vmem:[%s145] sm:$0xff] %vm197, %v189
      %199 = vst.msk [vmem:[%s145 + $0x8] sm:$0xff] %vm197, %v190
      %200 = vst.msk [vmem:[%s145 + $0x10] sm:$0xff] %vm197, %v191
      %201 = vst.msk [vmem:[%s145 + $0x18] sm:$0xff] %vm197, %v192
      %202 = vst.msk [vmem:[%s145 + $0x20] sm:$0xff] %vm197, %v193
      %203 = vst.msk [vmem:[%s145 + $0x28] sm:$0xff] %vm197, %v194
      %204 = vst.msk [vmem:[%s145 + $0x30] sm:$0xff] %vm197, %v195
      %205 = vst.msk [vmem:[%s145 + $0x38] sm:$0xff] %vm197, %v196
      %s206 = smul.u32 8, %s13
      %p207 = scmp.lt.s32.totalorder %s206, 15
      %s208 = scalar_select %p207, %s206, 15
      %s209 = smul.addr %s208, 8
      %s210 = scalar_lea.vmem %s2, %s209
      // Predicated region
      $region29: #{resnet_block_forward.7} parent=27 // pred_check
        %p211 = pneg %p78
      $region30: #{resnet_block_forward.7} parent=27 // pred_check_branch
        %213 = sbr.rel (%p211) target = $region32
      $region31: #{resnet_block_forward.7} parent=27 // pred_region
        %s214 = smul.u32 8, %s13
      $region32: #{resnet_block_forward.7} parent=27 // pred_fallthru
        _
    $region28: #{resnet_block_forward.7} parent=5 // pred_fallthru
      _
    %p215 = scmp.le.s32.totalorder 2, %s8
    // Predicated region
    $region33: #{resnet_block_forward.7} parent=5 // pred_check
      %p216 = pneg %p215
    $region34: #{resnet_block_forward.7} parent=5 // pred_check_branch
      %218 = sbr.rel (%p216) target = $region36
    $region35: #{resnet_block_forward.7} parent=5 // pred_region
      %s219 = ssub.s32 %s8, 2
      // Predicated region
      $region37: #{resnet_block_forward.7} parent=35 // pred_check
        %p220 = pneg %p84
      $region38: #{resnet_block_forward.7} parent=35 // pred_check_branch
        %222 = sbr.rel (%p220) target = $region40
      $region39: #{resnet_block_forward.7} parent=35 // pred_region
        %s223 = smul.u32 8, %s14
        %p224 = scmp.lt.s32.totalorder %s223, 15
        %s225 = scalar_select %p224, %s223, 15
        %s226 = smul.addr %s225, 8
        %s227 = scalar_lea.vmem %s2, %s226
      $region40: #{resnet_block_forward.7} parent=35 // pred_fallthru
        _
    $region36: #{resnet_block_forward.7} parent=5 // pred_fallthru
      _
  $region6: #{resnet_block_forward.7} parent=0 // loop_footer
    %s12 = sadd.s32 1, %s8
  $region7: #{resnet_block_forward.7} parent=0 // loop_footer_branch
    %7 = sbr.rel target = $region3
  $region8: #{resnet_block_forward.7} parent=0 // loop_exit
    _

// kernel: resnet_block_forward.6
$region0: #{resnet_block_forward.6}
  #allocation0 [shape = 'u32[]', space=smem, size = 0x4, offset = 0x4, fixed_abs, tag = 'smem constant byte address 0x4 - core index']
  #allocation1 [shape = 'u32[144,128]{1,0:T(1,128)}', space=vmem, size = 0x12000, scoped, tag = 'internal scratch']
  #allocation2 [shape = 'f32[8,8]{1,0:T(8,128)}', space=vmem, size = 0x1000, scoped, tag = 'scratch operand']
  #allocation3 [shape = 'f32[8,8]{1,0:T(8,128)}', space=vmem, size = 0x1000, scoped, tag = 'scratch operand']
  %s0 = inlined_call_operand.vmem [shape: bf16[128,72], index: 0, kind: input, shape index: {}]
  %s1 = inlined_call_operand.vmem [shape: bf16[72,8], index: 1, kind: input, shape index: {}]
  %s2 = inlined_call_operand.vmem [shape: f32[1,8], index: 2, kind: input, shape index: {}]
  %s3 = inlined_call_operand.vmem [shape: f32[1,8], index: 3, kind: input, shape index: {}]
  %s4 = inlined_call_operand.vmem [shape: bf16[128,8], index: 4, kind: output, shape index: {0}]
  %s5 = inlined_call_operand.vmem [shape: f32[2,8], index: 5, kind: output, shape index: {1}]
  %6 = xla_tuple %s4, %s5
  %s7 = sld [smem:[#allocation0]]
  $region65: #{resnet_block_forward.6} parent=0
    _
  %s9 = ssub.s32 1, %s7
  %s10 = scalar_select 0, %s9, %s7
  loop: start=0, step=1, limit=4
  $region2: #{resnet_block_forward.6} parent=0 // loop_pre_header
    _
  $region3: #{resnet_block_forward.6} parent=0 // loop_header
    %s12 = sphi 0, %s16
    %p13 = scmp.ge.s32.totalorder %s12, 4
    %s22 = sphi 0, %s24
    %s25 = sphi 0, %s22
    %s26 = sphi 0, %s25
    %s42 = sphi 0, %s26
    %s46 = sphi 0, %s46
    %s48 = sphi 0, %s46
    %s49 = sphi 0, %s48
    %s63 = sphi 0, %s49
    %s67 = sphi 0, %s67
    %s69 = sphi 0, %s67
    %s70 = sphi 0, %s69
    %s84 = sphi 0, %s70
    %s88 = sphi 0, %s88
    %s90 = sphi 0, %s88
    %s91 = sphi 0, %s90
    %s105 = sphi 0, %s91
    %s111 = sphi 0, %s113
    %s114 = sphi 0, %s111
    %s115 = sphi 0, %s114
    %s131 = sphi 0, %s115
    %s135 = sphi 0, %s135
    %s137 = sphi 0, %s135
    %s138 = sphi 0, %s137
    %s152 = sphi 0, %s138
  $region4: #{resnet_block_forward.6} parent=0 // loop_header_branch
    %15 = sbr.rel (%p13) target = $region8
  $region5: #{resnet_block_forward.6} parent=0 // loop_body
    %s17 = ssub.s32 %s12, 1
    %s18 = ssub.s32 %s12, 2
    %s19 = sadd.s32 %s12, 1
    %s20 = ssub.s32 %s12, %s19
    %p21 = scmp.eq.s32.totalorder %s20, 0
    %s23 = sadd.s32 %s22, 1
    %s24 = scalar_select %p21, %s22, %s23
    %p27 = pneg %p21
    %p28 = scmp.eq.s32.totalorder %s12, 1
    %p29 = por %p27, %p28
    %p30 = scmp.ne.s32.totalorder %s22, %s25
    %p31 = scmp.eq.s32.totalorder %s12, 0
    %p32 = por %p30, %p31
    %p33 = scmp.ne.s32.totalorder %s22, %s25
    %p34 = scmp.eq.s32.totalorder %s17, 1
    %p35 = por %p33, %p34
    %p36 = scmp.ne.s32.totalorder %s25, %s26
    %p37 = scmp.eq.s32.totalorder %s17, 0
    %p38 = por %p36, %p37
    %p39 = scmp.ne.s32.totalorder %s25, %s26
    %p40 = scmp.eq.s32.totalorder %s18, 1
    %p41 = por %p39, %p40
    %p43 = scmp.ne.s32.totalorder %s26, %s42
    %p44 = scmp.eq.s32.totalorder %s18, 0
    %p45 = por %p43, %p44
    %s47 = sadd.s32 %s46, 1
    %p50 = scmp.eq.s32.totalorder %s12, 1
    %p51 = scmp.ne.s32.totalorder %s46, %s48
    %p52 = scmp.eq.s32.totalorder %s12, 0
    %p53 = por %p51, %p52
    %p54 = scmp.ne.s32.totalorder %s46, %s48
    %p55 = scmp.eq.s32.totalorder %s17, 1
    %p56 = por %p54, %p55
    %p57 = scmp.ne.s32.totalorder %s48, %s49
    %p58 = scmp.eq.s32.totalorder %s17, 0
    %p59 = por %p57, %p58
    %p60 = scmp.ne.s32.totalorder %s48, %s49
    %p61 = scmp.eq.s32.totalorder %s18, 1
    %p62 = por %p60, %p61
    %p64 = scmp.ne.s32.totalorder %s49, %s63
    %p65 = scmp.eq.s32.totalorder %s18, 0
    %p66 = por %p64, %p65
    %s68 = sadd.s32 %s67, 1
    %p71 = scmp.eq.s32.totalorder %s12, 1
    %p72 = scmp.ne.s32.totalorder %s67, %s69
    %p73 = scmp.eq.s32.totalorder %s12, 0
    %p74 = por %p72, %p73
    %p75 = scmp.ne.s32.totalorder %s67, %s69
    %p76 = scmp.eq.s32.totalorder %s17, 1
    %p77 = por %p75, %p76
    %p78 = scmp.ne.s32.totalorder %s69, %s70
    %p79 = scmp.eq.s32.totalorder %s17, 0
    %p80 = por %p78, %p79
    %p81 = scmp.ne.s32.totalorder %s69, %s70
    %p82 = scmp.eq.s32.totalorder %s18, 1
    %p83 = por %p81, %p82
    %p85 = scmp.ne.s32.totalorder %s70, %s84
    %p86 = scmp.eq.s32.totalorder %s18, 0
    %p87 = por %p85, %p86
    %s89 = sadd.s32 %s88, 1
    %p92 = scmp.eq.s32.totalorder %s12, 1
    %p93 = scmp.ne.s32.totalorder %s88, %s90
    %p94 = scmp.eq.s32.totalorder %s12, 0
    %p95 = por %p93, %p94
    %p96 = scmp.ne.s32.totalorder %s88, %s90
    %p97 = scmp.eq.s32.totalorder %s17, 1
    %p98 = por %p96, %p97
    %p99 = scmp.ne.s32.totalorder %s90, %s91
    %p100 = scmp.eq.s32.totalorder %s17, 0
    %p101 = por %p99, %p100
    %p102 = scmp.ne.s32.totalorder %s90, %s91
    %p103 = scmp.eq.s32.totalorder %s18, 1
    %p104 = por %p102, %p103
    %p106 = scmp.ne.s32.totalorder %s91, %s105
    %p107 = scmp.eq.s32.totalorder %s18, 0
    %p108 = por %p106, %p107
    %s109 = ssub.s32 %s12, %s19
    %p110 = scmp.eq.s32.totalorder %s109, 0
    %s112 = sadd.s32 %s111, 1
    %s113 = scalar_select %p110, %s111, %s112
    %p116 = pneg %p110
    %p117 = scmp.eq.s32.totalorder %s12, 1
    %p118 = por %p116, %p117
    %p119 = scmp.ne.s32.totalorder %s111, %s114
    %p120 = scmp.eq.s32.totalorder %s12, 0
    %p121 = por %p119, %p120
    %p122 = scmp.ne.s32.totalorder %s111, %s114
    %p123 = scmp.eq.s32.totalorder %s17, 1
    %p124 = por %p122, %p123
    %p125 = scmp.ne.s32.totalorder %s114, %s115
    %p126 = scmp.eq.s32.totalorder %s17, 0
    %p127 = por %p125, %p126
    %p128 = scmp.ne.s32.totalorder %s114, %s115
    %p129 = scmp.eq.s32.totalorder %s18, 1
    %p130 = por %p128, %p129
    %p132 = scmp.ne.s32.totalorder %s115, %s131
    %p133 = scmp.eq.s32.totalorder %s18, 0
    %p134 = por %p132, %p133
    %s136 = sadd.s32 %s135, 1
    %p139 = scmp.eq.s32.totalorder %s12, 1
    %p140 = scmp.ne.s32.totalorder %s135, %s137
    %p141 = scmp.eq.s32.totalorder %s12, 0
    %p142 = por %p140, %p141
    %p143 = scmp.ne.s32.totalorder %s135, %s137
    %p144 = scmp.eq.s32.totalorder %s17, 1
    %p145 = por %p143, %p144
    %p146 = scmp.ne.s32.totalorder %s137, %s138
    %p147 = scmp.eq.s32.totalorder %s17, 0
    %p148 = por %p146, %p147
    %p149 = scmp.ne.s32.totalorder %s137, %s138
    %p150 = scmp.eq.s32.totalorder %s18, 1
    %p151 = por %p149, %p150
    %p153 = scmp.ne.s32.totalorder %s138, %s152
    %p154 = scmp.eq.s32.totalorder %s18, 0
    %p155 = por %p153, %p154
    %p156 = scmp.le.s32.totalorder 1, %s12
    %p157 = scmp.lt.s32.totalorder %s12, 3
    %p158 = pnand %p156, %p157
    %p159 = pneg %p158
    // Predicated region
    $region9: #{resnet_block_forward.6} parent=5 // pred_check
      _
    $region10: #{resnet_block_forward.6} parent=5 // pred_check_branch
      %161 = sbr.rel (%p158) target = $region12
    $region11: #{resnet_block_forward.6} parent=5 // pred_region
      %s162 = ssub.s32 %s12, 1
      // Predicated region
      $region13: #{resnet_block_forward.6} parent=11 // pred_check
        %p163 = pneg %p59
      $region14: #{resnet_block_forward.6} parent=11 // pred_check_branch
        %165 = sbr.rel (%p163) target = $region16
      $region15: #{resnet_block_forward.6} parent=11 // pred_region
        _
      $region16: #{resnet_block_forward.6} parent=11 // pred_fallthru
        _
      // Predicated region
      $region17: #{resnet_block_forward.6} parent=11 // pred_check
        %p166 = pneg %p80
      $region18: #{resnet_block_forward.6} parent=11 // pred_check_branch
        %168 = sbr.rel (%p166) target = $region20
      $region19: #{resnet_block_forward.6} parent=11 // pred_region
        _
      $region20: #{resnet_block_forward.6} parent=11 // pred_fallthru
        _
      // Predicated region
      $region21: #{resnet_block_forward.6} parent=11 // pred_check
        %p169 = pneg %p101
      $region22: #{resnet_block_forward.6} parent=11 // pred_check_branch
        %171 = sbr.rel (%p169) target = $region24
      $region23: #{resnet_block_forward.6} parent=11 // pred_region
        _
      $region24: #{resnet_block_forward.6} parent=11 // pred_fallthru
        _
    $region12: #{resnet_block_forward.6} parent=5 // pred_fallthru
      _
    %p172 = scmp.lt.s32.totalorder %s12, 2
    // Predicated region
    $region25: #{resnet_block_forward.6} parent=5 // pred_check
      %p173 = pneg %p172
    $region26: #{resnet_block_forward.6} parent=5 // pred_check_branch
      %175 = sbr.rel (%p173) target = $region28
    $region27: #{resnet_block_forward.6} parent=5 // pred_region
      // Predicated region
      $region29: #{resnet_block_forward.6} parent=27 // pred_check
        %p176 = pneg %p32
      $region30: #{resnet_block_forward.6} parent=27 // pred_check_branch
        %178 = sbr.rel (%p176) target = $region32
      $region31: #{resnet_block_forward.6} parent=27 // pred_region
        %s179 = smul.u32 8, %s12
        %p180 = scmp.lt.s32.totalorder %s179, 15
        %s181 = scalar_select %p180, %s179, 15
        %s182 = smul.addr %s181, 4
        %s183 = scalar_lea.vmem %s0, %s182
        %s184 = smul.u32 8, %s12
      $region32: #{resnet_block_forward.6} parent=27 // pred_fallthru
        _
    $region28: #{resnet_block_forward.6} parent=5 // pred_fallthru
      _
    %p185 = scmp.le.s32.totalorder 1, %s12
    %p186 = scmp.lt.s32.totalorder %s12, 3
    %p187 = pnand %p185, %p186
    %p188 = pneg %p187
    // Predicated region
    $region33: #{resnet_block_forward.6} parent=5 // pred_check
      _
    $region34: #{resnet_block_forward.6} parent=5 // pred_check_branch
      %190 = sbr.rel (%p187) target = $region36
    $region35: #{resnet_block_forward.6} parent=5 // pred_region
      %s191 = ssub.s32 %s12, 1
      %s192 = smul.u32 8, %s17
      %p193 = scmp.lt.s32.totalorder %s192, 15
      %s194 = scalar_select %p193, %s192, 15
      %s195 = smul.addr %s194, 4
      %s196 = scalar_lea.vmem %s0, %s195
      %p197 = pneg %p38
      %p198 = pneg %p35
      %p199 = pneg %p59
      %p200 = pneg %p56
      %p201 = pneg %p80
      %p202 = pneg %p77
      %p203 = pneg %p101
      %p204 = pneg %p98
      %p205 = pneg %p127
      %p206 = pneg %p124
      %s207 = smul.u32 8, %s17
      %p208 = scmp.lt.s32.totalorder %s207, 15
      %s209 = scalar_select %p208, %s207, 15
      %s210 = smul.addr %s209, 4
      %s211 = scalar_lea.vmem %s4, %s210
      %p212 = pneg %p148
      %p213 = pneg %p145
      %s214 = smul.u32 8, %s17
      %p215 = scmp.lt.s32.totalorder %s214, 15
      %s216 = scalar_select %p215, %s214, 15
      %s217 = smul.addr %s216, 4
      %s218 = scalar_lea.vmem %s0, %s217
      %s219 = smul.u32 8, %s17
      %s220 = smul.u32 8, %s17
      %p221 = scmp.lt.s32.totalorder %s220, 15
      %s222 = scalar_select %p221, %s220, 15
      %s223 = smul.addr %s222, 4
      %s224 = scalar_lea.vmem %s4, %s223
      %s225 = smul.u32 8, %s17
      %v227 = vld [vmem:[%s218] sm:$0xf]
      %v228 = vld [vmem:[%s218 + $0x4] sm:$0xf]
      %v229 = vld [vmem:[%s218 + $0x8] sm:$0xf]
      %v230 = vld [vmem:[%s218 + $0xc] sm:$0xf]
      %v231 = vld [vmem:[%s218 + $0x10] sm:$0xf]
      %v232 = vld [vmem:[%s218 + $0x14] sm:$0xf]
      %v233 = vld [vmem:[%s218 + $0x18] sm:$0xf]
      %v234 = vld [vmem:[%s218 + $0x1c] sm:$0xf]
      %v235 = vld [vmem:[%s1] sm:$0xf]
      %v236 = vld [vmem:[%s1 + $0x4] sm:$0xf]
      %v237 = vld [vmem:[%s1 + $0x8] sm:$0xf]
      %v238 = vld [vmem:[%s1 + $0xc] sm:$0xf]
      %v239 = vld [vmem:[%s1 + $0x10] sm:$0xf]
      %v240 = vld [vmem:[%s1 + $0x14] sm:$0xf]
      %v241 = vld [vmem:[%s1 + $0x18] sm:$0xf]
      %v242 = vld [vmem:[%s1 + $0x1c] sm:$0xf]
      %v243 = vld [vmem:[%s1 + $0x20] sm:$0xf]
      %v252 = vunpack.c.l.b16 %v227
      %v253 = vunpack.c.l.b16 %v228
      %v254 = vunpack.c.l.b16 %v229
      %v255 = vunpack.c.l.b16 %v230
      %v256 = vunpack.c.l.b16 %v231
      %v257 = vunpack.c.l.b16 %v232
      %v258 = vunpack.c.l.b16 %v233
      %v259 = vunpack.c.l.b16 %v234
      %v260 = vpack.c.b16 %v253, %v252
      %v261 = vpack.c.b16 %v255, %v254
      %v262 = vpack.c.b16 %v257, %v256
      %v263 = vpack.c.b16 %v259, %v258
      %v273 = vunpack.c.l.b16 %v235
      %v274 = vunpack.c.l.b16 %v236
      %v275 = vunpack.c.l.b16 %v237
      %v276 = vunpack.c.l.b16 %v238
      %v277 = vunpack.c.l.b16 %v239
      %v278 = vunpack.c.l.b16 %v240
      %v279 = vunpack.c.l.b16 %v241
      %v280 = vunpack.c.l.b16 %v242
      %v281 = vunpack.c.l.b16 %v243
      %v282 = vpack.c.b16 %v274, %v273
      %v283 = vpack.c.b16 %v276, %v275
      %v284 = vpack.c.b16 %v278, %v277
      %v285 = vpack.c.b16 %v280, %v279
      %v286 = vpack.c.b16 %v281, %v281
      %vm291 = vcmask 588800
      %v293 = vsel %vm291, %v260, 0
      %v296 = vsel %vm291, %v261, 0
      %v299 = vsel %vm291, %v262, 0
      %v302 = vsel %vm291, %v263, 0
      %vm304 = vcmask 1043456
      %v306 = vsel %vm304, %v286, 0
      %308 = vmatprep.subr.bf16.mxu0 0
      %309 = vmatpush1.bf16.msra.mxu0 %v282
      %310 = vmatprep.subr.bf16.mxu0 0
      %311 = vmatpush1.bf16.msra.mxu0 %v283
      %312 = vmatprep.subr.bf16.mxu0 0
      %313 = vmatpush1.bf16.msra.mxu0 %v284
      %314 = vmatprep.subr.bf16.mxu0 0
      %315 = vmatpush1.bf16.msra.mxu0 %v285
      %316 = vmatprep.subr.bf16.mxu0 0
      %317 = vmatpush1.bf16.msra.mxu0 %v306
      %318 = vmatprep.subr.bf16.mxu0 0
      %319 = vmatpush1.bf16.msra.mxu0 0
      %320 = vmatprep.subr.bf16.mxu0 0
      %321 = vmatpush1.bf16.msra.mxu0 0
      %322 = vmatprep.subr.bf16.mxu0 0
      %323 = vmatpush1.bf16.msra.mxu0 0
      %324 = vmatprep.subr.bf16.mxu0 0
      %325 = vmatpush1.bf16.msra.mxu0 0
      %326 = vmatprep.subr.bf16.mxu0 0
      %327 = vmatpush1.bf16.msra.mxu0 0
      %328 = vmatprep.subr.bf16.mxu0 0
      %329 = vmatpush1.bf16.msra.mxu0 0
      %330 = vmatprep.subr.bf16.mxu0 0
      %331 = vmatpush1.bf16.msra.mxu0 0
      %332 = vmatprep.subr.bf16.mxu0 0
      %333 = vmatpush1.bf16.msra.mxu0 0
      %334 = vmatprep.subr.bf16.mxu0 0
      %335 = vmatpush1.bf16.msra.mxu0 0
      %336 = vmatprep.subr.bf16.mxu0 0
      %337 = vmatpush1.bf16.msra.mxu0 0
      %338 = vmatprep.subr.bf16.mxu0 0
      %339 = vmatpush1.bf16.msra.mxu0 0
      %340 = vmatprep.mubr.bf16.mxu0 0
      %341 = vmatmul.mubr.bf16.gmra.mrb[0].mxu0 %v293
      %v342 = vpop.f32.mrb[0].mxu0
      %v343 = vadd.f32 0.0, %v342
      %v344 = vpop.f32.mrb[0].mxu0
      %v345 = vpop.f32.mrb[0].mxu0
      %v346 = vadd.f32 0.0, %v345
      %v347 = vpop.f32.mrb[0].mxu0
      %348 = vmatprep.mubr.bf16.mxu0 0
      %349 = vmatmul.mubr.bf16.gmra.mrb[0].mxu0 %v296
      %v350 = vpop.f32.mrb[0].mxu0
      %v351 = vadd.f32 0.0, %v350
      %v352 = vpop.f32.mrb[0].mxu0
      %v353 = vpop.f32.mrb[0].mxu0
      %v354 = vadd.f32 0.0, %v353
      %v355 = vpop.f32.mrb[0].mxu0
      %356 = vmatprep.mubr.bf16.mxu0 0
      %357 = vmatmul.mubr.bf16.gmra.mrb[0].mxu0 %v299
      %v358 = vpop.f32.mrb[0].mxu0
      %v359 = vadd.f32 0.0, %v358
      %v360 = vpop.f32.mrb[0].mxu0
      %v361 = vpop.f32.mrb[0].mxu0
      %v362 = vadd.f32 0.0, %v361
      %v363 = vpop.f32.mrb[0].mxu0
      %364 = vmatprep.mubr.bf16.mxu0 0
      %365 = vmatmul.mubr.bf16.gmra.mrb[0].mxu0 %v302
      %v366 = vpop.f32.mrb[0].mxu0
      %v367 = vadd.f32 0.0, %v366
      %v368 = vpop.f32.mrb[0].mxu0
      %v369 = vpop.f32.mrb[0].mxu0
      %v370 = vadd.f32 0.0, %v369
      %v371 = vpop.f32.mrb[0].mxu0
      %372 = vdwg.mxu0
      %v373 = vpack.c.bf16 %v346, %v343
      %v374 = vpack.c.bf16 %v354, %v351
      %v375 = vpack.c.bf16 %v362, %v359
      %v376 = vpack.c.bf16 %v370, %v367
      %v381 = vunpack.c.l.b16 %v373
      %v382 = vunpack.c.h.b16 %v373
      %v383 = vunpack.c.l.b16 %v374
      %v384 = vunpack.c.h.b16 %v374
      %v385 = vunpack.c.l.b16 %v375
      %v386 = vunpack.c.h.b16 %v375
      %v387 = vunpack.c.l.b16 %v376
      %v388 = vunpack.c.h.b16 %v376
      %v389 = vpack.c.b16 %v381, %v381
      %v390 = vpack.c.b16 %v382, %v382
      %v391 = vpack.c.b16 %v383, %v383
      %v392 = vpack.c.b16 %v384, %v384
      %v393 = vpack.c.b16 %v385, %v385
      %v394 = vpack.c.b16 %v386, %v386
      %v395 = vpack.c.b16 %v387, %v387
      %v396 = vpack.c.b16 %v388, %v388
      %vm405 = vcmask 60416
      %406 = vst.msk [vmem:[%s224] sm:$0xf] %vm405, %v389
      %407 = vst.msk [vmem:[%s224 + $0x4] sm:$0xf] %vm405, %v390
      %408 = vst.msk [vmem:[%s224 + $0x8] sm:$0xf] %vm405, %v391
      %409 = vst.msk [vmem:[%s224 + $0xc] sm:$0xf] %vm405, %v392
      %410 = vst.msk [vmem:[%s224 + $0x10] sm:$0xf] %vm405, %v393
      %411 = vst.msk [vmem:[%s224 + $0x14] sm:$0xf] %vm405, %v394
      %412 = vst.msk [vmem:[%s224 + $0x18] sm:$0xf] %vm405, %v395
      %413 = vst.msk [vmem:[%s224 + $0x1c] sm:$0xf] %vm405, %v396
      %p414 = scmp.eq.s32.totalorder %s17, 0
      // Predicated region
      $region37: #{resnet_block_forward.6} parent=35 // pred_check
        %p415 = pneg %p414
      $region38: #{resnet_block_forward.6} parent=35 // pred_check_branch
        %417 = sbr.rel (%p415) target = $region40
      $region39: #{resnet_block_forward.6} parent=35 // pred_region
        %vm418 = vcmask 64512
        %419 = vst.msk [vmem:[#allocation2] sm:$0xff] %vm418, 0.0
        %420 = vst.msk [vmem:[#allocation3] sm:$0xff] %vm418, 0.0
      $region40: #{resnet_block_forward.6} parent=35 // pred_fallthru
        _
      %v421 = vld [vmem:[#allocation2] sm:$0xff]
      %vm422 = vcmask 64512
      %v423 = vsel %vm422, %v343, 0.0
      %v424 = vsel %vm422, %v346, 0.0
      %v425 = vadd.f32 %v423, %v424
      %v426 = vsel %vm422, %v351, 0.0
      %v427 = vadd.f32 %v425, %v426
      %v428 = vsel %vm422, %v354, 0.0
      %v429 = vadd.f32 %v427, %v428
      %v430 = vsel %vm422, %v359, 0.0
      %v431 = vadd.f32 %v429, %v430
      %v432 = vsel %vm422, %v362, 0.0
      %v433 = vadd.f32 %v431, %v432
      %v434 = vsel %vm422, %v367, 0.0
      %v435 = vadd.f32 %v433, %v434
      %v436 = vsel %vm422, %v370, 0.0
      %v437 = vadd.f32 %v435, %v436
      %v438 = vadd.f32 %v421, %v437
      %439 = vst.msk [vmem:[#allocation2] sm:$0xff] %vm422, %v438
      %v440 = vld [vmem:[#allocation3] sm:$0xff]
      %v441 = vmul.f32 %v343, %v343
      %v442 = vmul.f32 %v346, %v346
      %v443 = vmul.f32 %v351, %v351
      %v444 = vmul.f32 %v354, %v354
      %v445 = vmul.f32 %v359, %v359
      %v446 = vmul.f32 %v362, %v362
      %v447 = vmul.f32 %v367, %v367
      %v448 = vmul.f32 %v370, %v370
      %v449 = vsel %vm422, %v441, 0.0
      %v450 = vsel %vm422, %v442, 0.0
      %v451 = vadd.f32 %v449, %v450
      %v452 = vsel %vm422, %v443, 0.0
      %v453 = vadd.f32 %v451, %v452
      %v454 = vsel %vm422, %v444, 0.0
      %v455 = vadd.f32 %v453, %v454
      %v456 = vsel %vm422, %v445, 0.0
      %v457 = vadd.f32 %v455, %v456
      %v458 = vsel %vm422, %v446, 0.0
      %v459 = vadd.f32 %v457, %v458
      %v460 = vsel %vm422, %v447, 0.0
      %v461 = vadd.f32 %v459, %v460
      %v462 = vsel %vm422, %v448, 0.0
      %v463 = vadd.f32 %v461, %v462
      %v464 = vadd.f32 %v440, %v463
      %465 = vst.msk [vmem:[#allocation3] sm:$0xff] %vm422, %v464
      %p466 = scmp.eq.s32.totalorder %s17, 1
      // Predicated region
      $region41: #{resnet_block_forward.6} parent=35 // pred_check
        %p467 = pneg %p466
      $region42: #{resnet_block_forward.6} parent=35 // pred_check_branch
        %469 = sbr.rel (%p467) target = $region44
      $region43: #{resnet_block_forward.6} parent=35 // pred_region
        %v470 = vld [vmem:[#allocation2] sm:$0xff]
        %v471 = vsel %vm422, %v470, 0.0
        %v472 = vrot.slane %v471, 4
        %v473 = vadd.f32 %v471, %v472
        %v474 = vrot.slane %v473, 2
        %v475 = vadd.f32 %v473, %v474
        %v476 = vrot.slane %v475, 1
        %v477 = vadd.f32 %v475, %v476
        %v478 = vmul.f32 %v477, 0.0078125
        %v479 = vld [vmem:[#allocation3] sm:$0xff]
        %v480 = vsel %vm422, %v479, 0.0
        %v481 = vrot.slane %v480, 4
        %v482 = vadd.f32 %v480, %v481
        %v483 = vrot.slane %v482, 2
        %v484 = vadd.f32 %v482, %v483
        %v485 = vrot.slane %v484, 1
        %v486 = vadd.f32 %v484, %v485
        %v487 = vmul.f32 %v486, 0.0078125
        %v488 = vmul.f32 %v478, %v478
        %v489 = vsub.f32 %v487, %v488
        %v490 = vmax.f32 %v489, 0.0
        %v491 = vld [vmem:[%s2] sm:$0x1]
        %v492 = vadd.f32 %v490, 1e-05
        %v493 = vrsqrt.pop %v492
        %v494 = vmul.f32 %v491, %v493
        %v495 = vld [vmem:[%s3] sm:$0x1]
        %v496 = vmul.f32 %v478, %v494
        %v497 = vsub.f32 %v495, %v496
        %vm498 = vcmask 57344
        %499 = vst.msk [vmem:[%s5] sm:$0x1] %vm498, %v494
        %500 = vst.msk [vmem:[%s5 + $0x1] sm:$0x1] %vm498, %v497
      $region44: #{resnet_block_forward.6} parent=35 // pred_fallthru
        _
      %s501 = smul.u32 8, %s17
      %p502 = scmp.lt.s32.totalorder %s501, 15
      %s503 = scalar_select %p502, %s501, 15
      %s504 = smul.addr %s503, 4
      %s505 = scalar_lea.vmem %s4, %s504
      // Predicated region
      $region45: #{resnet_block_forward.6} parent=35 // pred_check
        %p506 = pneg %p124
      $region46: #{resnet_block_forward.6} parent=35 // pred_check_branch
        %508 = sbr.rel (%p506) target = $region48
      $region47: #{resnet_block_forward.6} parent=35 // pred_region
        %s509 = smul.u32 8, %s17
      $region48: #{resnet_block_forward.6} parent=35 // pred_fallthru
        _
      // Predicated region
      $region49: #{resnet_block_forward.6} parent=35 // pred_check
        %p510 = pneg %p145
      $region50: #{resnet_block_forward.6} parent=35 // pred_check_branch
        %512 = sbr.rel (%p510) target = $region52
      $region51: #{resnet_block_forward.6} parent=35 // pred_region
        _
      $region52: #{resnet_block_forward.6} parent=35 // pred_fallthru
        _
      // Predicated region
      $region53: #{resnet_block_forward.6} parent=35 // pred_check
        %p513 = pneg %p145
      $region54: #{resnet_block_forward.6} parent=35 // pred_check_branch
        %515 = sbr.rel (%p513) target = $region56
      $region55: #{resnet_block_forward.6} parent=35 // pred_region
        _
      $region56: #{resnet_block_forward.6} parent=35 // pred_fallthru
        _
    $region36: #{resnet_block_forward.6} parent=5 // pred_fallthru
      _
    %p516 = scmp.le.s32.totalorder 2, %s12
    // Predicated region
    $region57: #{resnet_block_forward.6} parent=5 // pred_check
      %p517 = pneg %p516
    $region58: #{resnet_block_forward.6} parent=5 // pred_check_branch
      %519 = sbr.rel (%p517) target = $region60
    $region59: #{resnet_block_forward.6} parent=5 // pred_region
      %s520 = ssub.s32 %s12, 2
      // Predicated region
      $region61: #{resnet_block_forward.6} parent=59 // pred_check
        %p521 = pneg %p130
      $region62: #{resnet_block_forward.6} parent=59 // pred_check_branch
        %523 = sbr.rel (%p521) target = $region64
      $region63: #{resnet_block_forward.6} parent=59 // pred_region
        %s524 = smul.u32 8, %s18
        %p525 = scmp.lt.s32.totalorder %s524, 15
        %s526 = scalar_select %p525, %s524, 15
        %s527 = smul.addr %s526, 4
        %s528 = scalar_lea.vmem %s4, %s527
      $region64: #{resnet_block_forward.6} parent=59 // pred_fallthru
        _
    $region60: #{resnet_block_forward.6} parent=5 // pred_fallthru
      _
  $region6: #{resnet_block_forward.6} parent=0 // loop_footer
    %s16 = sadd.s32 1, %s12
  $region7: #{resnet_block_forward.6} parent=0 // loop_footer_branch
    %11 = sbr.rel target = $region3
  $region8: #{resnet_block_forward.6} parent=0 // loop_exit
    _

</llo_original>
